<compile_context>
chip_gen: v7x
topology: tpu7x:2x2x1
jax: 0.10.0
libtpu: 0.0.40
codegen_flags: <defaults>
</compile_context>

<pallas_src>
import jax
import jax.numpy as jnp
from jax.experimental import pallas as pl
from jax.experimental.pallas import tpu as pltpu


def lstm_forecast_kernel(x_ref, p_ref, y_ref):
    # x_ref: (T, B)       time-major input, I == 1 squeezed out in the wrapper
    # p_ref: (H+4, 4H)    packed params:
    #   rows 0..H-1 : w_hh^T  (gate-blocked columns i|f|g|o; i/f/o columns pre-scaled by 0.5)
    #   row  H      : w_ih^T  (same layout / pre-scale)
    #   row  H+1    : b_ih + b_hh (same layout / pre-scale)
    #   row  H+2    : w_out   (lanes 0..H-1, rest zero)  -- NOT pre-scaled
    #   row  H+3    : b_out   (lane 0, rest zero)        -- NOT pre-scaled
    # y_ref: (B, 1)
    T, B = x_ref.shape
    H4 = p_ref.shape[1]
    H = H4 // 4

    x = x_ref[...]                                   # (T, B) f32

    # ---- Hoisted parameter unpack (once; off the recurrent critical path) ----
    w_hh = p_ref[0:H, :]                             # (H, 4H) f32
    w_ih = p_ref[H:H + 1, :]                         # (1, 4H) f32
    b = p_ref[H + 1:H + 2, :]                        # (1, 4H) f32
    w_out = p_ref[H + 2:H + 3, 0:H]                  # (1, H)  f32
    b_out = p_ref[H + 3:H + 4, 0:1]                  # (1, 1)  f32

    def gate_cols(a, k):                             # static lane slice, hoisted (not per-step)
        return a[:, k * H:(k + 1) * H]

    # Per-gate recurrent weight blocks, cast once to bf16 for single-pass MXU dots.
    # They are loop-invariant across the unrolled steps (weight-stationary; at this size the
    # compiler keeps them staged -- explicit pltpu.matmul_push_rhs is not worth it here).
    whh = [gate_cols(w_hh, k).astype(jnp.bfloat16) for k in range(4)]        # 4 x (H, H) bf16

    # Hoisted input projection + bias for all timesteps, per gate (I == 1 -> outer product):
    #   xp[k][t, n, :] = x[t, n] * w_ih_k + b_k      (i/f/o already carry the 0.5 pre-scale)
    xp = [x[:, :, None] * gate_cols(w_ih, k)[None, :, :] + gate_cols(b, k)[None, :, :]
          for k in range(4)]                                                  # 4 x (T, B, H) f32

    h = jnp.zeros((B, H), jnp.float32)
    c = jnp.zeros((B, H), jnp.float32)
    half = jnp.float32(0.5)

    # Static unroll: T is small and fixed; the 4 MXU pushes and the EUP tanhs of each step are
    # mutually independent and pipeline.  No lane extracts anywhere on the h->c->h chain.
    for t in range(T):
        hb = h.astype(jnp.bfloat16)        # format-only pack; all other math stays f32
        zi = xp[0][t] + jnp.dot(hb, whh[0], preferred_element_type=jnp.float32)
        zf = xp[1][t] + jnp.dot(hb, whh[1], preferred_element_type=jnp.float32)
        zg = xp[2][t] + jnp.dot(hb, whh[2], preferred_element_type=jnp.float32)
        zo = xp[3][t] + jnp.dot(hb, whh[3], preferred_element_type=jnp.float32)
        # sigmoid(z) = 0.5*tanh(0.5*z) + 0.5 with the 0.5 folded into the packed weights:
        # one native EUP tanh per gate, no exp+recip, no mask/select.
        i_g = half * jnp.tanh(zi) + half
        f_g = half * jnp.tanh(zf) + half
        o_g = half * jnp.tanh(zo) + half
        g_g = jnp.tanh(zg)
        c = f_g * c + i_g * g_g
        h = o_g * jnp.tanh(c)

    # Output head on VPU/XLU: broadcast-mul + 16-lane reduce instead of a final MXU round-trip.
    y = jnp.sum(h * w_out, axis=-1, keepdims=True) + b_out                   # (B, 1)
    y_ref[...] = y


def lstm_forecast(x, w_ih, w_hh, b_ih, b_hh, w_out, b_out):
    """x: (B, T, I) with I == 1.  PyTorch-shaped params:
       w_ih (4H, I), w_hh (4H, H), b_ih (4H,), b_hh (4H,), w_out (1, H), b_out (1,)."""
    B, T, I = x.shape
    assert I == 1, "LSTMForecast uses input_size=1"
    H4 = w_ih.shape[0]
    H = H4 // 4
    f32 = jnp.float32

    # Layout glue outside the kernel.
    x_tb = jnp.transpose(jnp.asarray(x, f32)[:, :, 0], (1, 0))               # (T, B) time-major

    w_ih_t = jnp.asarray(w_ih, f32).T                                        # (1, 4H)
    w_hh_t = jnp.asarray(w_hh, f32).T                                        # (H, 4H)
    b = (jnp.asarray(b_ih, f32) + jnp.asarray(b_hh, f32)).reshape(1, H4)     # (1, 4H)

    # Fold the 0.5 pre-scale of the tanh-based sigmoid (sigmoid(z) = 0.5*tanh(0.5*z)+0.5) into
    # the i/f/o gate columns; the g gate (tanh) keeps scale 1.  Gate order i|f|g|o.
    col = jnp.arange(H4)
    is_g = (col >= 2 * H) & (col < 3 * H)
    scale = jnp.where(is_g, 1.0, 0.5).astype(f32)                            # (4H,)
    w_ih_t = w_ih_t * scale
    w_hh_t = w_hh_t * scale
    b = b * scale

    # Pack every parameter into one (H+4, 4H) slab -> a single prologue DMA.
    w_out_row = jnp.zeros((1, H4), f32).at[0, :H].set(jnp.asarray(w_out, f32)[0])
    b_out_row = jnp.zeros((1, H4), f32).at[0, 0].set(jnp.asarray(b_out, f32)[0])
    params = jnp.concatenate([w_hh_t, w_ih_t, b, w_out_row, b_out_row], axis=0)  # (H+4, 4H)

    vmem = pl.BlockSpec(memory_space=pltpu.MemorySpace.VMEM)
    # At B=2, T=8 everything (<6 KiB) fits VMEM on v5e/v6e/v7x; a single grid-less call is right.
    # Scaling notes (per review):
    #  * if B grows: add a batch grid axis with dimension_semantics=("parallel",) so the work
    #    shards across v7x's 2 TensorCores (with grid=() only one TC runs);
    #  * if T grows: tile time with an "arbitrary" axis carrying h/c in VMEM scratch, and
    #    re-derive VMEM usage against v7x's 64 MiB physical / 32 MiB default scoped limit
    #    (raise via pltpu.CompilerParams(vmem_limit_bytes=...)).
    return pl.pallas_call(
        lstm_forecast_kernel,
        out_shape=jax.ShapeDtypeStruct((B, 1), jnp.float32),
        in_specs=[vmem, vmem],
        out_specs=vmem,
    )(x_tb, params)


def _reference(x, w_ih, w_hh, b_ih, b_hh, w_out, b_out):
    """Pure-JAX (f32) reference of the PyTorch forward for sanity checking."""
    B, T, I = x.shape
    H = w_hh.shape[1]
    h = jnp.zeros((B, H), jnp.float32)
    c = jnp.zeros((B, H), jnp.float32)
    for t in range(T):
        gates = x[:, t, :] @ w_ih.T + b_ih + h @ w_hh.T + b_hh
        i_g = jax.nn.sigmoid(gates[:, 0 * H:1 * H])
        f_g = jax.nn.sigmoid(gates[:, 1 * H:2 * H])
        g_g = jnp.tanh(gates[:, 2 * H:3 * H])
        o_g = jax.nn.sigmoid(gates[:, 3 * H:4 * H])
        c = f_g * c + i_g * g_g
        h = o_g * jnp.tanh(c)
    return h @ w_out.T + b_out


if __name__ == "__main__":
    B, T, I, H = 2, 8, 1, 16

    key = jax.random.PRNGKey(0)
    ks = jax.random.split(key, 7)
    k_init = 1.0 / jnp.sqrt(H)  # PyTorch default uniform(-1/sqrt(H), 1/sqrt(H))

    x = jax.random.normal(ks[0], (B, T, I), jnp.float32)
    w_ih = jax.random.uniform(ks[1], (4 * H, I), jnp.float32, -k_init, k_init)
    w_hh = jax.random.uniform(ks[2], (4 * H, H), jnp.float32, -k_init, k_init)
    b_ih = jax.random.uniform(ks[3], (4 * H,), jnp.float32, -k_init, k_init)
    b_hh = jax.random.uniform(ks[4], (4 * H,), jnp.float32, -k_init, k_init)
    w_out = jax.random.uniform(ks[5], (1, H), jnp.float32, -k_init, k_init)
    b_out = jax.random.uniform(ks[6], (1,), jnp.float32, -k_init, k_init)

    y = lstm_forecast(x, w_ih, w_hh, b_ih, b_hh, w_out, b_out)
    jax.block_until_ready(y)

    y_ref = _reference(x, w_ih, w_hh, b_ih, b_hh, w_out, b_out)
    assert y.shape == (B, 1)
    # bf16 matmul operands on the recurrence (per perf review) -> relaxed tolerance against the
    # pure-f32 reference; this is a precision trade-off, not a bug.
    assert jnp.allclose(y, y_ref, atol=1e-2, rtol=1e-2), (y, y_ref)

    print("KERNEL_OK")
</pallas_src>

<mosaic_0001>
module attributes {stable_mosaic.version = 11 : i64} {
  func.func @lstm_forecast_kernel(%arg0: memref<8x2xf32, #tpu.memory_space<vmem>>, %arg1: memref<20x64xf32, #tpu.memory_space<vmem>>, %arg2: memref<2x1xf32, #tpu.memory_space<vmem>>) attributes {dimension_semantics = [], scalar_prefetch = 0 : i64, scratch_operands = 0 : i64, tpu.core_type = #tpu.core_type<tc>} {
    %c0 = arith.constant 0 : index
    %c0_0 = arith.constant 0 : index
    %0 = vector.load %arg0[%c0, %c0_0] : memref<8x2xf32, #tpu.memory_space<vmem>>, vector<8x2xf32>
    %c0_1 = arith.constant 0 : index
    %c0_2 = arith.constant 0 : index
    %1 = vector.load %arg1[%c0_1, %c0_2] : memref<20x64xf32, #tpu.memory_space<vmem>>, vector<16x64xf32>
    %c16 = arith.constant 16 : index
    %c0_3 = arith.constant 0 : index
    %2 = vector.load %arg1[%c16, %c0_3] : memref<20x64xf32, #tpu.memory_space<vmem>>, vector<1x64xf32>
    %c17 = arith.constant 17 : index
    %c0_4 = arith.constant 0 : index
    %3 = vector.load %arg1[%c17, %c0_4] : memref<20x64xf32, #tpu.memory_space<vmem>>, vector<1x64xf32>
    %c18 = arith.constant 18 : index
    %c0_5 = arith.constant 0 : index
    %4 = vector.load %arg1[%c18, %c0_5] : memref<20x64xf32, #tpu.memory_space<vmem>>, vector<1x16xf32>
    %c19 = arith.constant 19 : index
    %c0_6 = arith.constant 0 : index
    %5 = vector.load %arg1[%c19, %c0_6] : memref<20x64xf32, #tpu.memory_space<vmem>>, vector<1x1xf32>
    %6 = vector.extract_strided_slice %1 {offsets = [0, 0], sizes = [16, 16], strides = [1, 1]} : vector<16x64xf32> to vector<16x16xf32>
    %7 = arith.truncf %6 : vector<16x16xf32> to vector<16x16xbf16>
    %8 = vector.extract_strided_slice %1 {offsets = [0, 16], sizes = [16, 16], strides = [1, 1]} : vector<16x64xf32> to vector<16x16xf32>
    %9 = arith.truncf %8 : vector<16x16xf32> to vector<16x16xbf16>
    %10 = vector.extract_strided_slice %1 {offsets = [0, 32], sizes = [16, 16], strides = [1, 1]} : vector<16x64xf32> to vector<16x16xf32>
    %11 = arith.truncf %10 : vector<16x16xf32> to vector<16x16xbf16>
    %12 = vector.extract_strided_slice %1 {offsets = [0, 48], sizes = [16, 16], strides = [1, 1]} : vector<16x64xf32> to vector<16x16xf32>
    %13 = arith.truncf %12 : vector<16x16xf32> to vector<16x16xbf16>
    %14 = vector.shape_cast %0 : vector<8x2xf32> to vector<8x2x1xf32>
    %15 = vector.extract_strided_slice %2 {offsets = [0, 0], sizes = [1, 16], strides = [1, 1]} : vector<1x64xf32> to vector<1x16xf32>
    %16 = vector.shape_cast %15 : vector<1x16xf32> to vector<1x1x16xf32>
    %17 = vector.broadcast %14 : vector<8x2x1xf32> to vector<8x2x16xf32>
    %18 = vector.broadcast %16 : vector<1x1x16xf32> to vector<8x2x16xf32>
    %19 = arith.mulf %17, %18 : vector<8x2x16xf32>
    %20 = vector.extract_strided_slice %3 {offsets = [0, 0], sizes = [1, 16], strides = [1, 1]} : vector<1x64xf32> to vector<1x16xf32>
    %21 = vector.shape_cast %20 : vector<1x16xf32> to vector<1x1x16xf32>
    %22 = vector.broadcast %21 : vector<1x1x16xf32> to vector<8x2x16xf32>
    %23 = arith.addf %19, %22 : vector<8x2x16xf32>
    %24 = vector.shape_cast %0 : vector<8x2xf32> to vector<8x2x1xf32>
    %25 = vector.extract_strided_slice %2 {offsets = [0, 16], sizes = [1, 16], strides = [1, 1]} : vector<1x64xf32> to vector<1x16xf32>
    %26 = vector.shape_cast %25 : vector<1x16xf32> to vector<1x1x16xf32>
    %27 = vector.broadcast %24 : vector<8x2x1xf32> to vector<8x2x16xf32>
    %28 = vector.broadcast %26 : vector<1x1x16xf32> to vector<8x2x16xf32>
    %29 = arith.mulf %27, %28 : vector<8x2x16xf32>
    %30 = vector.extract_strided_slice %3 {offsets = [0, 16], sizes = [1, 16], strides = [1, 1]} : vector<1x64xf32> to vector<1x16xf32>
    %31 = vector.shape_cast %30 : vector<1x16xf32> to vector<1x1x16xf32>
    %32 = vector.broadcast %31 : vector<1x1x16xf32> to vector<8x2x16xf32>
    %33 = arith.addf %29, %32 : vector<8x2x16xf32>
    %34 = vector.shape_cast %0 : vector<8x2xf32> to vector<8x2x1xf32>
    %35 = vector.extract_strided_slice %2 {offsets = [0, 32], sizes = [1, 16], strides = [1, 1]} : vector<1x64xf32> to vector<1x16xf32>
    %36 = vector.shape_cast %35 : vector<1x16xf32> to vector<1x1x16xf32>
    %37 = vector.broadcast %34 : vector<8x2x1xf32> to vector<8x2x16xf32>
    %38 = vector.broadcast %36 : vector<1x1x16xf32> to vector<8x2x16xf32>
    %39 = arith.mulf %37, %38 : vector<8x2x16xf32>
    %40 = vector.extract_strided_slice %3 {offsets = [0, 32], sizes = [1, 16], strides = [1, 1]} : vector<1x64xf32> to vector<1x16xf32>
    %41 = vector.shape_cast %40 : vector<1x16xf32> to vector<1x1x16xf32>
    %42 = vector.broadcast %41 : vector<1x1x16xf32> to vector<8x2x16xf32>
    %43 = arith.addf %39, %42 : vector<8x2x16xf32>
    %44 = vector.shape_cast %0 : vector<8x2xf32> to vector<8x2x1xf32>
    %45 = vector.extract_strided_slice %2 {offsets = [0, 48], sizes = [1, 16], strides = [1, 1]} : vector<1x64xf32> to vector<1x16xf32>
    %46 = vector.shape_cast %45 : vector<1x16xf32> to vector<1x1x16xf32>
    %47 = vector.broadcast %44 : vector<8x2x1xf32> to vector<8x2x16xf32>
    %48 = vector.broadcast %46 : vector<1x1x16xf32> to vector<8x2x16xf32>
    %49 = arith.mulf %47, %48 : vector<8x2x16xf32>
    %50 = vector.extract_strided_slice %3 {offsets = [0, 48], sizes = [1, 16], strides = [1, 1]} : vector<1x64xf32> to vector<1x16xf32>
    %51 = vector.shape_cast %50 : vector<1x16xf32> to vector<1x1x16xf32>
    %52 = vector.broadcast %51 : vector<1x1x16xf32> to vector<8x2x16xf32>
    %53 = arith.addf %49, %52 : vector<8x2x16xf32>
    %cst = arith.constant 0.000000e+00 : f32
    %54 = vector.broadcast %cst : f32 to vector<2x16xf32>
    %cst_7 = arith.constant 0.000000e+00 : f32
    %55 = vector.broadcast %cst_7 : f32 to vector<2x16xf32>
    %56 = arith.truncf %54 : vector<2x16xf32> to vector<2x16xbf16>
    %57 = vector.extract_strided_slice %23 {offsets = [0, 0, 0], sizes = [1, 2, 16], strides = [1, 1, 1]} : vector<8x2x16xf32> to vector<1x2x16xf32>
    %58 = vector.shape_cast %57 : vector<1x2x16xf32> to vector<2x16xf32>
    %cst_8 = arith.constant dense<0.000000e+00> : vector<2x16xf32>
    %59 = tpu.matmul %56, %7, %cst_8 {dimension_numbers = #tpu.dot_dimension_numbers<[1], [0], [0], [1], [0, 0, 1, 1], [], []>} : vector<2x16xbf16>, vector<16x16xbf16>, vector<2x16xf32> -> vector<2x16xf32>
    %60 = arith.addf %58, %59 : vector<2x16xf32>
    %61 = vector.extract_strided_slice %33 {offsets = [0, 0, 0], sizes = [1, 2, 16], strides = [1, 1, 1]} : vector<8x2x16xf32> to vector<1x2x16xf32>
    %62 = vector.shape_cast %61 : vector<1x2x16xf32> to vector<2x16xf32>
    %cst_9 = arith.constant dense<0.000000e+00> : vector<2x16xf32>
    %63 = tpu.matmul %56, %9, %cst_9 {dimension_numbers = #tpu.dot_dimension_numbers<[1], [0], [0], [1], [0, 0, 1, 1], [], []>} : vector<2x16xbf16>, vector<16x16xbf16>, vector<2x16xf32> -> vector<2x16xf32>
    %64 = arith.addf %62, %63 : vector<2x16xf32>
    %65 = vector.extract_strided_slice %43 {offsets = [0, 0, 0], sizes = [1, 2, 16], strides = [1, 1, 1]} : vector<8x2x16xf32> to vector<1x2x16xf32>
    %66 = vector.shape_cast %65 : vector<1x2x16xf32> to vector<2x16xf32>
    %cst_10 = arith.constant dense<0.000000e+00> : vector<2x16xf32>
    %67 = tpu.matmul %56, %11, %cst_10 {dimension_numbers = #tpu.dot_dimension_numbers<[1], [0], [0], [1], [0, 0, 1, 1], [], []>} : vector<2x16xbf16>, vector<16x16xbf16>, vector<2x16xf32> -> vector<2x16xf32>
    %68 = arith.addf %66, %67 : vector<2x16xf32>
    %69 = vector.extract_strided_slice %53 {offsets = [0, 0, 0], sizes = [1, 2, 16], strides = [1, 1, 1]} : vector<8x2x16xf32> to vector<1x2x16xf32>
    %70 = vector.shape_cast %69 : vector<1x2x16xf32> to vector<2x16xf32>
    %cst_11 = arith.constant dense<0.000000e+00> : vector<2x16xf32>
    %71 = tpu.matmul %56, %13, %cst_11 {dimension_numbers = #tpu.dot_dimension_numbers<[1], [0], [0], [1], [0, 0, 1, 1], [], []>} : vector<2x16xbf16>, vector<16x16xbf16>, vector<2x16xf32> -> vector<2x16xf32>
    %72 = arith.addf %70, %71 : vector<2x16xf32>
    %73 = math.tanh %60 : vector<2x16xf32>
    %cst_12 = arith.constant 5.000000e-01 : f32
    %74 = vector.broadcast %cst_12 : f32 to vector<2x16xf32>
    %75 = arith.mulf %74, %73 : vector<2x16xf32>
    %cst_13 = arith.constant 5.000000e-01 : f32
    %76 = vector.broadcast %cst_13 : f32 to vector<2x16xf32>
    %77 = arith.addf %75, %76 : vector<2x16xf32>
    %78 = math.tanh %64 : vector<2x16xf32>
    %cst_14 = arith.constant 5.000000e-01 : f32
    %79 = vector.broadcast %cst_14 : f32 to vector<2x16xf32>
    %80 = arith.mulf %79, %78 : vector<2x16xf32>
    %cst_15 = arith.constant 5.000000e-01 : f32
    %81 = vector.broadcast %cst_15 : f32 to vector<2x16xf32>
    %82 = arith.addf %80, %81 : vector<2x16xf32>
    %83 = math.tanh %72 : vector<2x16xf32>
    %cst_16 = arith.constant 5.000000e-01 : f32
    %84 = vector.broadcast %cst_16 : f32 to vector<2x16xf32>
    %85 = arith.mulf %84, %83 : vector<2x16xf32>
    %cst_17 = arith.constant 5.000000e-01 : f32
    %86 = vector.broadcast %cst_17 : f32 to vector<2x16xf32>
    %87 = arith.addf %85, %86 : vector<2x16xf32>
    %88 = math.tanh %68 : vector<2x16xf32>
    %89 = arith.mulf %82, %55 : vector<2x16xf32>
    %90 = arith.mulf %77, %88 : vector<2x16xf32>
    %91 = arith.addf %89, %90 : vector<2x16xf32>
    %92 = math.tanh %91 : vector<2x16xf32>
    %93 = arith.mulf %87, %92 : vector<2x16xf32>
    %94 = arith.truncf %93 : vector<2x16xf32> to vector<2x16xbf16>
    %95 = vector.extract_strided_slice %23 {offsets = [1, 0, 0], sizes = [1, 2, 16], strides = [1, 1, 1]} : vector<8x2x16xf32> to vector<1x2x16xf32>
    %96 = vector.shape_cast %95 : vector<1x2x16xf32> to vector<2x16xf32>
    %cst_18 = arith.constant dense<0.000000e+00> : vector<2x16xf32>
    %97 = tpu.matmul %94, %7, %cst_18 {dimension_numbers = #tpu.dot_dimension_numbers<[1], [0], [0], [1], [0, 0, 1, 1], [], []>} : vector<2x16xbf16>, vector<16x16xbf16>, vector<2x16xf32> -> vector<2x16xf32>
    %98 = arith.addf %96, %97 : vector<2x16xf32>
    %99 = vector.extract_strided_slice %33 {offsets = [1, 0, 0], sizes = [1, 2, 16], strides = [1, 1, 1]} : vector<8x2x16xf32> to vector<1x2x16xf32>
    %100 = vector.shape_cast %99 : vector<1x2x16xf32> to vector<2x16xf32>
    %cst_19 = arith.constant dense<0.000000e+00> : vector<2x16xf32>
    %101 = tpu.matmul %94, %9, %cst_19 {dimension_numbers = #tpu.dot_dimension_numbers<[1], [0], [0], [1], [0, 0, 1, 1], [], []>} : vector<2x16xbf16>, vector<16x16xbf16>, vector<2x16xf32> -> vector<2x16xf32>
    %102 = arith.addf %100, %101 : vector<2x16xf32>
    %103 = vector.extract_strided_slice %43 {offsets = [1, 0, 0], sizes = [1, 2, 16], strides = [1, 1, 1]} : vector<8x2x16xf32> to vector<1x2x16xf32>
    %104 = vector.shape_cast %103 : vector<1x2x16xf32> to vector<2x16xf32>
    %cst_20 = arith.constant dense<0.000000e+00> : vector<2x16xf32>
    %105 = tpu.matmul %94, %11, %cst_20 {dimension_numbers = #tpu.dot_dimension_numbers<[1], [0], [0], [1], [0, 0, 1, 1], [], []>} : vector<2x16xbf16>, vector<16x16xbf16>, vector<2x16xf32> -> vector<2x16xf32>
    %106 = arith.addf %104, %105 : vector<2x16xf32>
    %107 = vector.extract_strided_slice %53 {offsets = [1, 0, 0], sizes = [1, 2, 16], strides = [1, 1, 1]} : vector<8x2x16xf32> to vector<1x2x16xf32>
    %108 = vector.shape_cast %107 : vector<1x2x16xf32> to vector<2x16xf32>
    %cst_21 = arith.constant dense<0.000000e+00> : vector<2x16xf32>
    %109 = tpu.matmul %94, %13, %cst_21 {dimension_numbers = #tpu.dot_dimension_numbers<[1], [0], [0], [1], [0, 0, 1, 1], [], []>} : vector<2x16xbf16>, vector<16x16xbf16>, vector<2x16xf32> -> vector<2x16xf32>
    %110 = arith.addf %108, %109 : vector<2x16xf32>
    %111 = math.tanh %98 : vector<2x16xf32>
    %cst_22 = arith.constant 5.000000e-01 : f32
    %112 = vector.broadcast %cst_22 : f32 to vector<2x16xf32>
    %113 = arith.mulf %112, %111 : vector<2x16xf32>
    %cst_23 = arith.constant 5.000000e-01 : f32
    %114 = vector.broadcast %cst_23 : f32 to vector<2x16xf32>
    %115 = arith.addf %113, %114 : vector<2x16xf32>
    %116 = math.tanh %102 : vector<2x16xf32>
    %cst_24 = arith.constant 5.000000e-01 : f32
    %117 = vector.broadcast %cst_24 : f32 to vector<2x16xf32>
    %118 = arith.mulf %117, %116 : vector<2x16xf32>
    %cst_25 = arith.constant 5.000000e-01 : f32
    %119 = vector.broadcast %cst_25 : f32 to vector<2x16xf32>
    %120 = arith.addf %118, %119 : vector<2x16xf32>
    %121 = math.tanh %110 : vector<2x16xf32>
    %cst_26 = arith.constant 5.000000e-01 : f32
    %122 = vector.broadcast %cst_26 : f32 to vector<2x16xf32>
    %123 = arith.mulf %122, %121 : vector<2x16xf32>
    %cst_27 = arith.constant 5.000000e-01 : f32
    %124 = vector.broadcast %cst_27 : f32 to vector<2x16xf32>
    %125 = arith.addf %123, %124 : vector<2x16xf32>
    %126 = math.tanh %106 : vector<2x16xf32>
    %127 = arith.mulf %120, %91 : vector<2x16xf32>
    %128 = arith.mulf %115, %126 : vector<2x16xf32>
    %129 = arith.addf %127, %128 : vector<2x16xf32>
    %130 = math.tanh %129 : vector<2x16xf32>
    %131 = arith.mulf %125, %130 : vector<2x16xf32>
    %132 = arith.truncf %131 : vector<2x16xf32> to vector<2x16xbf16>
    %133 = vector.extract_strided_slice %23 {offsets = [2, 0, 0], sizes = [1, 2, 16], strides = [1, 1, 1]} : vector<8x2x16xf32> to vector<1x2x16xf32>
    %134 = vector.shape_cast %133 : vector<1x2x16xf32> to vector<2x16xf32>
    %cst_28 = arith.constant dense<0.000000e+00> : vector<2x16xf32>
    %135 = tpu.matmul %132, %7, %cst_28 {dimension_numbers = #tpu.dot_dimension_numbers<[1], [0], [0], [1], [0, 0, 1, 1], [], []>} : vector<2x16xbf16>, vector<16x16xbf16>, vector<2x16xf32> -> vector<2x16xf32>
    %136 = arith.addf %134, %135 : vector<2x16xf32>
    %137 = vector.extract_strided_slice %33 {offsets = [2, 0, 0], sizes = [1, 2, 16], strides = [1, 1, 1]} : vector<8x2x16xf32> to vector<1x2x16xf32>
    %138 = vector.shape_cast %137 : vector<1x2x16xf32> to vector<2x16xf32>
    %cst_29 = arith.constant dense<0.000000e+00> : vector<2x16xf32>
    %139 = tpu.matmul %132, %9, %cst_29 {dimension_numbers = #tpu.dot_dimension_numbers<[1], [0], [0], [1], [0, 0, 1, 1], [], []>} : vector<2x16xbf16>, vector<16x16xbf16>, vector<2x16xf32> -> vector<2x16xf32>
    %140 = arith.addf %138, %139 : vector<2x16xf32>
    %141 = vector.extract_strided_slice %43 {offsets = [2, 0, 0], sizes = [1, 2, 16], strides = [1, 1, 1]} : vector<8x2x16xf32> to vector<1x2x16xf32>
    %142 = vector.shape_cast %141 : vector<1x2x16xf32> to vector<2x16xf32>
    %cst_30 = arith.constant dense<0.000000e+00> : vector<2x16xf32>
    %143 = tpu.matmul %132, %11, %cst_30 {dimension_numbers = #tpu.dot_dimension_numbers<[1], [0], [0], [1], [0, 0, 1, 1], [], []>} : vector<2x16xbf16>, vector<16x16xbf16>, vector<2x16xf32> -> vector<2x16xf32>
    %144 = arith.addf %142, %143 : vector<2x16xf32>
    %145 = vector.extract_strided_slice %53 {offsets = [2, 0, 0], sizes = [1, 2, 16], strides = [1, 1, 1]} : vector<8x2x16xf32> to vector<1x2x16xf32>
    %146 = vector.shape_cast %145 : vector<1x2x16xf32> to vector<2x16xf32>
    %cst_31 = arith.constant dense<0.000000e+00> : vector<2x16xf32>
    %147 = tpu.matmul %132, %13, %cst_31 {dimension_numbers = #tpu.dot_dimension_numbers<[1], [0], [0], [1], [0, 0, 1, 1], [], []>} : vector<2x16xbf16>, vector<16x16xbf16>, vector<2x16xf32> -> vector<2x16xf32>
    %148 = arith.addf %146, %147 : vector<2x16xf32>
    %149 = math.tanh %136 : vector<2x16xf32>
    %cst_32 = arith.constant 5.000000e-01 : f32
    %150 = vector.broadcast %cst_32 : f32 to vector<2x16xf32>
    %151 = arith.mulf %150, %149 : vector<2x16xf32>
    %cst_33 = arith.constant 5.000000e-01 : f32
    %152 = vector.broadcast %cst_33 : f32 to vector<2x16xf32>
    %153 = arith.addf %151, %152 : vector<2x16xf32>
    %154 = math.tanh %140 : vector<2x16xf32>
    %cst_34 = arith.constant 5.000000e-01 : f32
    %155 = vector.broadcast %cst_34 : f32 to vector<2x16xf32>
    %156 = arith.mulf %155, %154 : vector<2x16xf32>
    %cst_35 = arith.constant 5.000000e-01 : f32
    %157 = vector.broadcast %cst_35 : f32 to vector<2x16xf32>
    %158 = arith.addf %156, %157 : vector<2x16xf32>
    %159 = math.tanh %148 : vector<2x16xf32>
    %cst_36 = arith.constant 5.000000e-01 : f32
    %160 = vector.broadcast %cst_36 : f32 to vector<2x16xf32>
    %161 = arith.mulf %160, %159 : vector<2x16xf32>
    %cst_37 = arith.constant 5.000000e-01 : f32
    %162 = vector.broadcast %cst_37 : f32 to vector<2x16xf32>
    %163 = arith.addf %161, %162 : vector<2x16xf32>
    %164 = math.tanh %144 : vector<2x16xf32>
    %165 = arith.mulf %158, %129 : vector<2x16xf32>
    %166 = arith.mulf %153, %164 : vector<2x16xf32>
    %167 = arith.addf %165, %166 : vector<2x16xf32>
    %168 = math.tanh %167 : vector<2x16xf32>
    %169 = arith.mulf %163, %168 : vector<2x16xf32>
    %170 = arith.truncf %169 : vector<2x16xf32> to vector<2x16xbf16>
    %171 = vector.extract_strided_slice %23 {offsets = [3, 0, 0], sizes = [1, 2, 16], strides = [1, 1, 1]} : vector<8x2x16xf32> to vector<1x2x16xf32>
    %172 = vector.shape_cast %171 : vector<1x2x16xf32> to vector<2x16xf32>
    %cst_38 = arith.constant dense<0.000000e+00> : vector<2x16xf32>
    %173 = tpu.matmul %170, %7, %cst_38 {dimension_numbers = #tpu.dot_dimension_numbers<[1], [0], [0], [1], [0, 0, 1, 1], [], []>} : vector<2x16xbf16>, vector<16x16xbf16>, vector<2x16xf32> -> vector<2x16xf32>
    %174 = arith.addf %172, %173 : vector<2x16xf32>
    %175 = vector.extract_strided_slice %33 {offsets = [3, 0, 0], sizes = [1, 2, 16], strides = [1, 1, 1]} : vector<8x2x16xf32> to vector<1x2x16xf32>
    %176 = vector.shape_cast %175 : vector<1x2x16xf32> to vector<2x16xf32>
    %cst_39 = arith.constant dense<0.000000e+00> : vector<2x16xf32>
    %177 = tpu.matmul %170, %9, %cst_39 {dimension_numbers = #tpu.dot_dimension_numbers<[1], [0], [0], [1], [0, 0, 1, 1], [], []>} : vector<2x16xbf16>, vector<16x16xbf16>, vector<2x16xf32> -> vector<2x16xf32>
    %178 = arith.addf %176, %177 : vector<2x16xf32>
    %179 = vector.extract_strided_slice %43 {offsets = [3, 0, 0], sizes = [1, 2, 16], strides = [1, 1, 1]} : vector<8x2x16xf32> to vector<1x2x16xf32>
    %180 = vector.shape_cast %179 : vector<1x2x16xf32> to vector<2x16xf32>
    %cst_40 = arith.constant dense<0.000000e+00> : vector<2x16xf32>
    %181 = tpu.matmul %170, %11, %cst_40 {dimension_numbers = #tpu.dot_dimension_numbers<[1], [0], [0], [1], [0, 0, 1, 1], [], []>} : vector<2x16xbf16>, vector<16x16xbf16>, vector<2x16xf32> -> vector<2x16xf32>
    %182 = arith.addf %180, %181 : vector<2x16xf32>
    %183 = vector.extract_strided_slice %53 {offsets = [3, 0, 0], sizes = [1, 2, 16], strides = [1, 1, 1]} : vector<8x2x16xf32> to vector<1x2x16xf32>
    %184 = vector.shape_cast %183 : vector<1x2x16xf32> to vector<2x16xf32>
    %cst_41 = arith.constant dense<0.000000e+00> : vector<2x16xf32>
    %185 = tpu.matmul %170, %13, %cst_41 {dimension_numbers = #tpu.dot_dimension_numbers<[1], [0], [0], [1], [0, 0, 1, 1], [], []>} : vector<2x16xbf16>, vector<16x16xbf16>, vector<2x16xf32> -> vector<2x16xf32>
    %186 = arith.addf %184, %185 : vector<2x16xf32>
    %187 = math.tanh %174 : vector<2x16xf32>
    %cst_42 = arith.constant 5.000000e-01 : f32
    %188 = vector.broadcast %cst_42 : f32 to vector<2x16xf32>
    %189 = arith.mulf %188, %187 : vector<2x16xf32>
    %cst_43 = arith.constant 5.000000e-01 : f32
    %190 = vector.broadcast %cst_43 : f32 to vector<2x16xf32>
    %191 = arith.addf %189, %190 : vector<2x16xf32>
    %192 = math.tanh %178 : vector<2x16xf32>
    %cst_44 = arith.constant 5.000000e-01 : f32
    %193 = vector.broadcast %cst_44 : f32 to vector<2x16xf32>
    %194 = arith.mulf %193, %192 : vector<2x16xf32>
    %cst_45 = arith.constant 5.000000e-01 : f32
    %195 = vector.broadcast %cst_45 : f32 to vector<2x16xf32>
    %196 = arith.addf %194, %195 : vector<2x16xf32>
    %197 = math.tanh %186 : vector<2x16xf32>
    %cst_46 = arith.constant 5.000000e-01 : f32
    %198 = vector.broadcast %cst_46 : f32 to vector<2x16xf32>
    %199 = arith.mulf %198, %197 : vector<2x16xf32>
    %cst_47 = arith.constant 5.000000e-01 : f32
    %200 = vector.broadcast %cst_47 : f32 to vector<2x16xf32>
    %201 = arith.addf %199, %200 : vector<2x16xf32>
    %202 = math.tanh %182 : vector<2x16xf32>
    %203 = arith.mulf %196, %167 : vector<2x16xf32>
    %204 = arith.mulf %191, %202 : vector<2x16xf32>
    %205 = arith.addf %203, %204 : vector<2x16xf32>
    %206 = math.tanh %205 : vector<2x16xf32>
    %207 = arith.mulf %201, %206 : vector<2x16xf32>
    %208 = arith.truncf %207 : vector<2x16xf32> to vector<2x16xbf16>
    %209 = vector.extract_strided_slice %23 {offsets = [4, 0, 0], sizes = [1, 2, 16], strides = [1, 1, 1]} : vector<8x2x16xf32> to vector<1x2x16xf32>
    %210 = vector.shape_cast %209 : vector<1x2x16xf32> to vector<2x16xf32>
    %cst_48 = arith.constant dense<0.000000e+00> : vector<2x16xf32>
    %211 = tpu.matmul %208, %7, %cst_48 {dimension_numbers = #tpu.dot_dimension_numbers<[1], [0], [0], [1], [0, 0, 1, 1], [], []>} : vector<2x16xbf16>, vector<16x16xbf16>, vector<2x16xf32> -> vector<2x16xf32>
    %212 = arith.addf %210, %211 : vector<2x16xf32>
    %213 = vector.extract_strided_slice %33 {offsets = [4, 0, 0], sizes = [1, 2, 16], strides = [1, 1, 1]} : vector<8x2x16xf32> to vector<1x2x16xf32>
    %214 = vector.shape_cast %213 : vector<1x2x16xf32> to vector<2x16xf32>
    %cst_49 = arith.constant dense<0.000000e+00> : vector<2x16xf32>
    %215 = tpu.matmul %208, %9, %cst_49 {dimension_numbers = #tpu.dot_dimension_numbers<[1], [0], [0], [1], [0, 0, 1, 1], [], []>} : vector<2x16xbf16>, vector<16x16xbf16>, vector<2x16xf32> -> vector<2x16xf32>
    %216 = arith.addf %214, %215 : vector<2x16xf32>
    %217 = vector.extract_strided_slice %43 {offsets = [4, 0, 0], sizes = [1, 2, 16], strides = [1, 1, 1]} : vector<8x2x16xf32> to vector<1x2x16xf32>
    %218 = vector.shape_cast %217 : vector<1x2x16xf32> to vector<2x16xf32>
    %cst_50 = arith.constant dense<0.000000e+00> : vector<2x16xf32>
    %219 = tpu.matmul %208, %11, %cst_50 {dimension_numbers = #tpu.dot_dimension_numbers<[1], [0], [0], [1], [0, 0, 1, 1], [], []>} : vector<2x16xbf16>, vector<16x16xbf16>, vector<2x16xf32> -> vector<2x16xf32>
    %220 = arith.addf %218, %219 : vector<2x16xf32>
    %221 = vector.extract_strided_slice %53 {offsets = [4, 0, 0], sizes = [1, 2, 16], strides = [1, 1, 1]} : vector<8x2x16xf32> to vector<1x2x16xf32>
    %222 = vector.shape_cast %221 : vector<1x2x16xf32> to vector<2x16xf32>
    %cst_51 = arith.constant dense<0.000000e+00> : vector<2x16xf32>
    %223 = tpu.matmul %208, %13, %cst_51 {dimension_numbers = #tpu.dot_dimension_numbers<[1], [0], [0], [1], [0, 0, 1, 1], [], []>} : vector<2x16xbf16>, vector<16x16xbf16>, vector<2x16xf32> -> vector<2x16xf32>
    %224 = arith.addf %222, %223 : vector<2x16xf32>
    %225 = math.tanh %212 : vector<2x16xf32>
    %cst_52 = arith.constant 5.000000e-01 : f32
    %226 = vector.broadcast %cst_52 : f32 to vector<2x16xf32>
    %227 = arith.mulf %226, %225 : vector<2x16xf32>
    %cst_53 = arith.constant 5.000000e-01 : f32
    %228 = vector.broadcast %cst_53 : f32 to vector<2x16xf32>
    %229 = arith.addf %227, %228 : vector<2x16xf32>
    %230 = math.tanh %216 : vector<2x16xf32>
    %cst_54 = arith.constant 5.000000e-01 : f32
    %231 = vector.broadcast %cst_54 : f32 to vector<2x16xf32>
    %232 = arith.mulf %231, %230 : vector<2x16xf32>
    %cst_55 = arith.constant 5.000000e-01 : f32
    %233 = vector.broadcast %cst_55 : f32 to vector<2x16xf32>
    %234 = arith.addf %232, %233 : vector<2x16xf32>
    %235 = math.tanh %224 : vector<2x16xf32>
    %cst_56 = arith.constant 5.000000e-01 : f32
    %236 = vector.broadcast %cst_56 : f32 to vector<2x16xf32>
    %237 = arith.mulf %236, %235 : vector<2x16xf32>
    %cst_57 = arith.constant 5.000000e-01 : f32
    %238 = vector.broadcast %cst_57 : f32 to vector<2x16xf32>
    %239 = arith.addf %237, %238 : vector<2x16xf32>
    %240 = math.tanh %220 : vector<2x16xf32>
    %241 = arith.mulf %234, %205 : vector<2x16xf32>
    %242 = arith.mulf %229, %240 : vector<2x16xf32>
    %243 = arith.addf %241, %242 : vector<2x16xf32>
    %244 = math.tanh %243 : vector<2x16xf32>
    %245 = arith.mulf %239, %244 : vector<2x16xf32>
    %246 = arith.truncf %245 : vector<2x16xf32> to vector<2x16xbf16>
    %247 = vector.extract_strided_slice %23 {offsets = [5, 0, 0], sizes = [1, 2, 16], strides = [1, 1, 1]} : vector<8x2x16xf32> to vector<1x2x16xf32>
    %248 = vector.shape_cast %247 : vector<1x2x16xf32> to vector<2x16xf32>
    %cst_58 = arith.constant dense<0.000000e+00> : vector<2x16xf32>
    %249 = tpu.matmul %246, %7, %cst_58 {dimension_numbers = #tpu.dot_dimension_numbers<[1], [0], [0], [1], [0, 0, 1, 1], [], []>} : vector<2x16xbf16>, vector<16x16xbf16>, vector<2x16xf32> -> vector<2x16xf32>
    %250 = arith.addf %248, %249 : vector<2x16xf32>
    %251 = vector.extract_strided_slice %33 {offsets = [5, 0, 0], sizes = [1, 2, 16], strides = [1, 1, 1]} : vector<8x2x16xf32> to vector<1x2x16xf32>
    %252 = vector.shape_cast %251 : vector<1x2x16xf32> to vector<2x16xf32>
    %cst_59 = arith.constant dense<0.000000e+00> : vector<2x16xf32>
    %253 = tpu.matmul %246, %9, %cst_59 {dimension_numbers = #tpu.dot_dimension_numbers<[1], [0], [0], [1], [0, 0, 1, 1], [], []>} : vector<2x16xbf16>, vector<16x16xbf16>, vector<2x16xf32> -> vector<2x16xf32>
    %254 = arith.addf %252, %253 : vector<2x16xf32>
    %255 = vector.extract_strided_slice %43 {offsets = [5, 0, 0], sizes = [1, 2, 16], strides = [1, 1, 1]} : vector<8x2x16xf32> to vector<1x2x16xf32>
    %256 = vector.shape_cast %255 : vector<1x2x16xf32> to vector<2x16xf32>
    %cst_60 = arith.constant dense<0.000000e+00> : vector<2x16xf32>
    %257 = tpu.matmul %246, %11, %cst_60 {dimension_numbers = #tpu.dot_dimension_numbers<[1], [0], [0], [1], [0, 0, 1, 1], [], []>} : vector<2x16xbf16>, vector<16x16xbf16>, vector<2x16xf32> -> vector<2x16xf32>
    %258 = arith.addf %256, %257 : vector<2x16xf32>
    %259 = vector.extract_strided_slice %53 {offsets = [5, 0, 0], sizes = [1, 2, 16], strides = [1, 1, 1]} : vector<8x2x16xf32> to vector<1x2x16xf32>
    %260 = vector.shape_cast %259 : vector<1x2x16xf32> to vector<2x16xf32>
    %cst_61 = arith.constant dense<0.000000e+00> : vector<2x16xf32>
    %261 = tpu.matmul %246, %13, %cst_61 {dimension_numbers = #tpu.dot_dimension_numbers<[1], [0], [0], [1], [0, 0, 1, 1], [], []>} : vector<2x16xbf16>, vector<16x16xbf16>, vector<2x16xf32> -> vector<2x16xf32>
    %262 = arith.addf %260, %261 : vector<2x16xf32>
    %263 = math.tanh %250 : vector<2x16xf32>
    %cst_62 = arith.constant 5.000000e-01 : f32
    %264 = vector.broadcast %cst_62 : f32 to vector<2x16xf32>
    %265 = arith.mulf %264, %263 : vector<2x16xf32>
    %cst_63 = arith.constant 5.000000e-01 : f32
    %266 = vector.broadcast %cst_63 : f32 to vector<2x16xf32>
    %267 = arith.addf %265, %266 : vector<2x16xf32>
    %268 = math.tanh %254 : vector<2x16xf32>
    %cst_64 = arith.constant 5.000000e-01 : f32
    %269 = vector.broadcast %cst_64 : f32 to vector<2x16xf32>
    %270 = arith.mulf %269, %268 : vector<2x16xf32>
    %cst_65 = arith.constant 5.000000e-01 : f32
    %271 = vector.broadcast %cst_65 : f32 to vector<2x16xf32>
    %272 = arith.addf %270, %271 : vector<2x16xf32>
    %273 = math.tanh %262 : vector<2x16xf32>
    %cst_66 = arith.constant 5.000000e-01 : f32
    %274 = vector.broadcast %cst_66 : f32 to vector<2x16xf32>
    %275 = arith.mulf %274, %273 : vector<2x16xf32>
    %cst_67 = arith.constant 5.000000e-01 : f32
    %276 = vector.broadcast %cst_67 : f32 to vector<2x16xf32>
    %277 = arith.addf %275, %276 : vector<2x16xf32>
    %278 = math.tanh %258 : vector<2x16xf32>
    %279 = arith.mulf %272, %243 : vector<2x16xf32>
    %280 = arith.mulf %267, %278 : vector<2x16xf32>
    %281 = arith.addf %279, %280 : vector<2x16xf32>
    %282 = math.tanh %281 : vector<2x16xf32>
    %283 = arith.mulf %277, %282 : vector<2x16xf32>
    %284 = arith.truncf %283 : vector<2x16xf32> to vector<2x16xbf16>
    %285 = vector.extract_strided_slice %23 {offsets = [6, 0, 0], sizes = [1, 2, 16], strides = [1, 1, 1]} : vector<8x2x16xf32> to vector<1x2x16xf32>
    %286 = vector.shape_cast %285 : vector<1x2x16xf32> to vector<2x16xf32>
    %cst_68 = arith.constant dense<0.000000e+00> : vector<2x16xf32>
    %287 = tpu.matmul %284, %7, %cst_68 {dimension_numbers = #tpu.dot_dimension_numbers<[1], [0], [0], [1], [0, 0, 1, 1], [], []>} : vector<2x16xbf16>, vector<16x16xbf16>, vector<2x16xf32> -> vector<2x16xf32>
    %288 = arith.addf %286, %287 : vector<2x16xf32>
    %289 = vector.extract_strided_slice %33 {offsets = [6, 0, 0], sizes = [1, 2, 16], strides = [1, 1, 1]} : vector<8x2x16xf32> to vector<1x2x16xf32>
    %290 = vector.shape_cast %289 : vector<1x2x16xf32> to vector<2x16xf32>
    %cst_69 = arith.constant dense<0.000000e+00> : vector<2x16xf32>
    %291 = tpu.matmul %284, %9, %cst_69 {dimension_numbers = #tpu.dot_dimension_numbers<[1], [0], [0], [1], [0, 0, 1, 1], [], []>} : vector<2x16xbf16>, vector<16x16xbf16>, vector<2x16xf32> -> vector<2x16xf32>
    %292 = arith.addf %290, %291 : vector<2x16xf32>
    %293 = vector.extract_strided_slice %43 {offsets = [6, 0, 0], sizes = [1, 2, 16], strides = [1, 1, 1]} : vector<8x2x16xf32> to vector<1x2x16xf32>
    %294 = vector.shape_cast %293 : vector<1x2x16xf32> to vector<2x16xf32>
    %cst_70 = arith.constant dense<0.000000e+00> : vector<2x16xf32>
    %295 = tpu.matmul %284, %11, %cst_70 {dimension_numbers = #tpu.dot_dimension_numbers<[1], [0], [0], [1], [0, 0, 1, 1], [], []>} : vector<2x16xbf16>, vector<16x16xbf16>, vector<2x16xf32> -> vector<2x16xf32>
    %296 = arith.addf %294, %295 : vector<2x16xf32>
    %297 = vector.extract_strided_slice %53 {offsets = [6, 0, 0], sizes = [1, 2, 16], strides = [1, 1, 1]} : vector<8x2x16xf32> to vector<1x2x16xf32>
    %298 = vector.shape_cast %297 : vector<1x2x16xf32> to vector<2x16xf32>
    %cst_71 = arith.constant dense<0.000000e+00> : vector<2x16xf32>
    %299 = tpu.matmul %284, %13, %cst_71 {dimension_numbers = #tpu.dot_dimension_numbers<[1], [0], [0], [1], [0, 0, 1, 1], [], []>} : vector<2x16xbf16>, vector<16x16xbf16>, vector<2x16xf32> -> vector<2x16xf32>
    %300 = arith.addf %298, %299 : vector<2x16xf32>
    %301 = math.tanh %288 : vector<2x16xf32>
    %cst_72 = arith.constant 5.000000e-01 : f32
    %302 = vector.broadcast %cst_72 : f32 to vector<2x16xf32>
    %303 = arith.mulf %302, %301 : vector<2x16xf32>
    %cst_73 = arith.constant 5.000000e-01 : f32
    %304 = vector.broadcast %cst_73 : f32 to vector<2x16xf32>
    %305 = arith.addf %303, %304 : vector<2x16xf32>
    %306 = math.tanh %292 : vector<2x16xf32>
    %cst_74 = arith.constant 5.000000e-01 : f32
    %307 = vector.broadcast %cst_74 : f32 to vector<2x16xf32>
    %308 = arith.mulf %307, %306 : vector<2x16xf32>
    %cst_75 = arith.constant 5.000000e-01 : f32
    %309 = vector.broadcast %cst_75 : f32 to vector<2x16xf32>
    %310 = arith.addf %308, %309 : vector<2x16xf32>
    %311 = math.tanh %300 : vector<2x16xf32>
    %cst_76 = arith.constant 5.000000e-01 : f32
    %312 = vector.broadcast %cst_76 : f32 to vector<2x16xf32>
    %313 = arith.mulf %312, %311 : vector<2x16xf32>
    %cst_77 = arith.constant 5.000000e-01 : f32
    %314 = vector.broadcast %cst_77 : f32 to vector<2x16xf32>
    %315 = arith.addf %313, %314 : vector<2x16xf32>
    %316 = math.tanh %296 : vector<2x16xf32>
    %317 = arith.mulf %310, %281 : vector<2x16xf32>
    %318 = arith.mulf %305, %316 : vector<2x16xf32>
    %319 = arith.addf %317, %318 : vector<2x16xf32>
    %320 = math.tanh %319 : vector<2x16xf32>
    %321 = arith.mulf %315, %320 : vector<2x16xf32>
    %322 = arith.truncf %321 : vector<2x16xf32> to vector<2x16xbf16>
    %323 = vector.extract_strided_slice %23 {offsets = [7, 0, 0], sizes = [1, 2, 16], strides = [1, 1, 1]} : vector<8x2x16xf32> to vector<1x2x16xf32>
    %324 = vector.shape_cast %323 : vector<1x2x16xf32> to vector<2x16xf32>
    %cst_78 = arith.constant dense<0.000000e+00> : vector<2x16xf32>
    %325 = tpu.matmul %322, %7, %cst_78 {dimension_numbers = #tpu.dot_dimension_numbers<[1], [0], [0], [1], [0, 0, 1, 1], [], []>} : vector<2x16xbf16>, vector<16x16xbf16>, vector<2x16xf32> -> vector<2x16xf32>
    %326 = arith.addf %324, %325 : vector<2x16xf32>
    %327 = vector.extract_strided_slice %33 {offsets = [7, 0, 0], sizes = [1, 2, 16], strides = [1, 1, 1]} : vector<8x2x16xf32> to vector<1x2x16xf32>
    %328 = vector.shape_cast %327 : vector<1x2x16xf32> to vector<2x16xf32>
    %cst_79 = arith.constant dense<0.000000e+00> : vector<2x16xf32>
    %329 = tpu.matmul %322, %9, %cst_79 {dimension_numbers = #tpu.dot_dimension_numbers<[1], [0], [0], [1], [0, 0, 1, 1], [], []>} : vector<2x16xbf16>, vector<16x16xbf16>, vector<2x16xf32> -> vector<2x16xf32>
    %330 = arith.addf %328, %329 : vector<2x16xf32>
    %331 = vector.extract_strided_slice %43 {offsets = [7, 0, 0], sizes = [1, 2, 16], strides = [1, 1, 1]} : vector<8x2x16xf32> to vector<1x2x16xf32>
    %332 = vector.shape_cast %331 : vector<1x2x16xf32> to vector<2x16xf32>
    %cst_80 = arith.constant dense<0.000000e+00> : vector<2x16xf32>
    %333 = tpu.matmul %322, %11, %cst_80 {dimension_numbers = #tpu.dot_dimension_numbers<[1], [0], [0], [1], [0, 0, 1, 1], [], []>} : vector<2x16xbf16>, vector<16x16xbf16>, vector<2x16xf32> -> vector<2x16xf32>
    %334 = arith.addf %332, %333 : vector<2x16xf32>
    %335 = vector.extract_strided_slice %53 {offsets = [7, 0, 0], sizes = [1, 2, 16], strides = [1, 1, 1]} : vector<8x2x16xf32> to vector<1x2x16xf32>
    %336 = vector.shape_cast %335 : vector<1x2x16xf32> to vector<2x16xf32>
    %cst_81 = arith.constant dense<0.000000e+00> : vector<2x16xf32>
    %337 = tpu.matmul %322, %13, %cst_81 {dimension_numbers = #tpu.dot_dimension_numbers<[1], [0], [0], [1], [0, 0, 1, 1], [], []>} : vector<2x16xbf16>, vector<16x16xbf16>, vector<2x16xf32> -> vector<2x16xf32>
    %338 = arith.addf %336, %337 : vector<2x16xf32>
    %339 = math.tanh %326 : vector<2x16xf32>
    %cst_82 = arith.constant 5.000000e-01 : f32
    %340 = vector.broadcast %cst_82 : f32 to vector<2x16xf32>
    %341 = arith.mulf %340, %339 : vector<2x16xf32>
    %cst_83 = arith.constant 5.000000e-01 : f32
    %342 = vector.broadcast %cst_83 : f32 to vector<2x16xf32>
    %343 = arith.addf %341, %342 : vector<2x16xf32>
    %344 = math.tanh %330 : vector<2x16xf32>
    %cst_84 = arith.constant 5.000000e-01 : f32
    %345 = vector.broadcast %cst_84 : f32 to vector<2x16xf32>
    %346 = arith.mulf %345, %344 : vector<2x16xf32>
    %cst_85 = arith.constant 5.000000e-01 : f32
    %347 = vector.broadcast %cst_85 : f32 to vector<2x16xf32>
    %348 = arith.addf %346, %347 : vector<2x16xf32>
    %349 = math.tanh %338 : vector<2x16xf32>
    %cst_86 = arith.constant 5.000000e-01 : f32
    %350 = vector.broadcast %cst_86 : f32 to vector<2x16xf32>
    %351 = arith.mulf %350, %349 : vector<2x16xf32>
    %cst_87 = arith.constant 5.000000e-01 : f32
    %352 = vector.broadcast %cst_87 : f32 to vector<2x16xf32>
    %353 = arith.addf %351, %352 : vector<2x16xf32>
    %354 = math.tanh %334 : vector<2x16xf32>
    %355 = arith.mulf %348, %319 : vector<2x16xf32>
    %356 = arith.mulf %343, %354 : vector<2x16xf32>
    %357 = arith.addf %355, %356 : vector<2x16xf32>
    %358 = math.tanh %357 : vector<2x16xf32>
    %359 = arith.mulf %353, %358 : vector<2x16xf32>
    %360 = vector.broadcast %4 : vector<1x16xf32> to vector<2x16xf32>
    %361 = arith.mulf %359, %360 : vector<2x16xf32>
    %cst_88 = arith.constant dense<0.000000e+00> : vector<2xf32>
    %362 = vector.multi_reduction <add>, %361, %cst_88 [1] : vector<2x16xf32> to vector<2xf32>
    %363 = vector.shape_cast %362 : vector<2xf32> to vector<2x1xf32>
    %364 = vector.broadcast %5 : vector<1x1xf32> to vector<2x1xf32>
    %365 = arith.addf %363, %364 : vector<2x1xf32>
    %c0_89 = arith.constant 0 : index
    %c0_90 = arith.constant 0 : index
    %366 = vector.load %arg2[%c0_89, %c0_90] : memref<2x1xf32, #tpu.memory_space<vmem>>, vector<2x1xf32>
    tpu.vector_store %arg2[%c0_89, %c0_90], %365 {strides = array<i32>} : memref<2x1xf32, #tpu.memory_space<vmem>>, vector<2x1xf32>,
    return
  }
}

</mosaic_0001>

<llo_original>
// kernel: tpu_custom_call.1
$region0: #{tpu_custom_call.1}
  #allocation0 [shape = 'u32[]', space=smem, size = 0x4, offset = 0x4, fixed_abs, tag = 'smem constant byte address 0x4 - core index']
  #allocation1 [shape = 'u32[144,128]{1,0:T(1,128)}', space=vmem, size = 0x12000, scoped, tag = 'internal scratch']
  %s0 = inlined_call_operand.vmem [shape: f32[8,2], index: 0, kind: input, shape index: {}]
  %s1 = inlined_call_operand.hbm [shape: f32[20,64], index: 1, kind: input, shape index: {}]
  %s2 = inlined_call_operand.vmem [shape: f32[2,1], index: 2, kind: output, shape index: {}]
  %s3 = sld [smem:[#allocation0]]
  $region22: #{tpu_custom_call.1} parent=0
    _
  %s5 = ssub.s32 1, %s3
  %s6 = scalar_select 0, %s5, %s3
  $region1: #{tpu_custom_call.1} parent=0
    #allocation2 [shape = 'u8[12288]{0}', space=vmem, size = 0x3000, scoped, tag = 'input window, operand 1, single buffered']
    #allocation3 [shape = 's32[1]{0}', space=sflag, size = 0x4, scoped, tag = 'scoped memory for tpu_custom_call.1']
    %7 = vsyncpa [#allocation3], 0
    // Predicated region
    $region2: #{tpu_custom_call.1} parent=1 // pred_check
      _
    $region3: #{tpu_custom_call.1} parent=1 // pred_check_branch
      %9 = sbr.rel (0) target = $region5
    $region4: #{tpu_custom_call.1} parent=1 // pred_region
      _
    $region5: #{tpu_custom_call.1} parent=1 // pred_fallthru
      _
    // Predicated region
    $region6: #{tpu_custom_call.1} parent=1 // pred_check
      _
    $region7: #{tpu_custom_call.1} parent=1 // pred_check_branch
      %11 = sbr.rel (0) target = $region9
    $region8: #{tpu_custom_call.1} parent=1 // pred_region
      %s13 = ssub.s32 384, 384
      %14 = vsyncadd [#allocation3], %s13
      %s15 = sshll.u32 [#allocation2], 4
      %s16 = int_to_ptr.vmem [resolvable:$true] %s15
      %21 = dma.hbm_to_vmem [thread:$0]  %s1, 384, %s16, [#allocation3], 128, 128, 8
    $region9: #{tpu_custom_call.1} parent=1 // pred_fallthru
      _
    // Predicated region
    $region10: #{tpu_custom_call.1} parent=1 // pred_check
      _
    $region11: #{tpu_custom_call.1} parent=1 // pred_check_branch
      %23 = sbr.rel (0) target = $region13
    $region12: #{tpu_custom_call.1} parent=1 // pred_region
      %24 = dma.done [#allocation3], 384
    $region13: #{tpu_custom_call.1} parent=1 // pred_fallthru
      _
    %v26 = vld [vmem:[%s0] sm:$0xff]
    %v27 = vld [vmem:[#allocation2] sm:$0xff]
    %v28 = vld [vmem:[#allocation2 + $0x8] sm:$0xff]
    %v29 = vld [vmem:[#allocation2 + $0x10] sm:$0x1]
    %v30 = vld [vmem:[#allocation2 + $0x11] sm:$0x1]
    %v31 = vld [vmem:[#allocation2 + $0x12] sm:$0x1]
    %v32 = vld [vmem:[#allocation2 + $0x13] sm:$0x1]
    %v33 = vpack.c.bf16 %v28, %v27
    %v34 = vlaneseq
    %v35 = vshrl.u32 %v34, 7
    %v36 = vsub.s32 0, %v35
    %v37 = vrot.slane %v26, %v36
    %39 = vbcast.lane.b32.xlu0 %v37, 256
    %v40 = vpop.permute.xlu0 %39
    %v41 = vlaneseq
    %v42 = vshrl.u32 %v41, 7
    %v43 = vsub.s32 1, %v42
    %v44 = vrot.slane %v26, %v43
    %46 = vbcast.lane.b32.xlu0 %v44, 256
    %v47 = vpop.permute.xlu0 %46
    %v48 = vlaneseq
    %v49 = vshrl.u32 %v48, 7
    %v50 = vsub.s32 2, %v49
    %v51 = vrot.slane %v26, %v50
    %53 = vbcast.lane.b32.xlu0 %v51, 256
    %v54 = vpop.permute.xlu0 %53
    %v55 = vlaneseq
    %v56 = vshrl.u32 %v55, 7
    %v57 = vsub.s32 3, %v56
    %v58 = vrot.slane %v26, %v57
    %60 = vbcast.lane.b32.xlu0 %v58, 256
    %v61 = vpop.permute.xlu0 %60
    %v62 = vlaneseq
    %v63 = vshrl.u32 %v62, 7
    %v64 = vsub.s32 4, %v63
    %v65 = vrot.slane %v26, %v64
    %67 = vbcast.lane.b32.xlu0 %v65, 256
    %v68 = vpop.permute.xlu0 %67
    %v69 = vlaneseq
    %v70 = vshrl.u32 %v69, 7
    %v71 = vsub.s32 5, %v70
    %v72 = vrot.slane %v26, %v71
    %74 = vbcast.lane.b32.xlu0 %v72, 256
    %v75 = vpop.permute.xlu0 %74
    %v76 = vlaneseq
    %v77 = vshrl.u32 %v76, 7
    %v78 = vsub.s32 6, %v77
    %v79 = vrot.slane %v26, %v78
    %81 = vbcast.lane.b32.xlu0 %v79, 256
    %v82 = vpop.permute.xlu0 %81
    %v83 = vlaneseq
    %v84 = vshrl.u32 %v83, 7
    %v85 = vsub.s32 7, %v84
    %v86 = vrot.slane %v26, %v85
    %88 = vbcast.lane.b32.xlu0 %v86, 256
    %v89 = vpop.permute.xlu0 %88
    %v90 = vlaneseq
    %v91 = vshrl.u32 %v90, 7
    %v92 = vsub.s32 0, %v91
    %v93 = vrot.slane %v29, %v92
    %v94 = vmul.f32 %v40, %v93
    %v95 = vmul.f32 %v47, %v93
    %v96 = vmul.f32 %v54, %v93
    %v97 = vmul.f32 %v61, %v93
    %v98 = vmul.f32 %v68, %v93
    %v99 = vmul.f32 %v75, %v93
    %v100 = vmul.f32 %v82, %v93
    %v101 = vmul.f32 %v89, %v93
    %v102 = vlaneseq
    %v103 = vshrl.u32 %v102, 7
    %v104 = vsub.s32 0, %v103
    %v105 = vrot.slane %v30, %v104
    %v106 = vadd.f32 %v94, %v105
    %v107 = vadd.f32 %v95, %v105
    %v108 = vadd.f32 %v96, %v105
    %v109 = vadd.f32 %v97, %v105
    %v110 = vadd.f32 %v98, %v105
    %v111 = vadd.f32 %v99, %v105
    %v112 = vadd.f32 %v100, %v105
    %v113 = vadd.f32 %v101, %v105
    %vm114 = vcmask 130048
    %v116 = vsel %vm114, 0, 0
    %118 = vmatprep.subr.bf16.mxu0 0
    %119 = vmatpush1.bf16.msra.mxu0 %v33
    %120 = vmatprep.subr.bf16.mxu0 0
    %121 = vmatpush1.bf16.msra.mxu0 0
    %122 = vmatprep.subr.bf16.mxu0 0
    %123 = vmatpush1.bf16.msra.mxu0 0
    %124 = vmatprep.subr.bf16.mxu0 0
    %125 = vmatpush1.bf16.msra.mxu0 0
    %126 = vmatprep.subr.bf16.mxu0 0
    %127 = vmatpush1.bf16.msra.mxu0 0
    %128 = vmatprep.subr.bf16.mxu0 0
    %129 = vmatpush1.bf16.msra.mxu0 0
    %130 = vmatprep.subr.bf16.mxu0 0
    %131 = vmatpush1.bf16.msra.mxu0 0
    %132 = vmatprep.subr.bf16.mxu0 0
    %133 = vmatpush1.bf16.msra.mxu0 0
    %134 = vmatprep.subr.bf16.mxu0 0
    %135 = vmatpush1.bf16.msra.mxu0 0
    %136 = vmatprep.subr.bf16.mxu0 0
    %137 = vmatpush1.bf16.msra.mxu0 0
    %138 = vmatprep.subr.bf16.mxu0 0
    %139 = vmatpush1.bf16.msra.mxu0 0
    %140 = vmatprep.subr.bf16.mxu0 0
    %141 = vmatpush1.bf16.msra.mxu0 0
    %142 = vmatprep.subr.bf16.mxu0 0
    %143 = vmatpush1.bf16.msra.mxu0 0
    %144 = vmatprep.subr.bf16.mxu0 0
    %145 = vmatpush1.bf16.msra.mxu0 0
    %146 = vmatprep.subr.bf16.mxu0 0
    %147 = vmatpush1.bf16.msra.mxu0 0
    %148 = vmatprep.subr.bf16.mxu0 0
    %149 = vmatpush1.bf16.msra.mxu0 0
    %150 = vmatprep.mubr.bf16.mxu0 0
    %151 = vmatmul.mubr.bf16.gmra.mrb[0].mxu0 %v116
    %v152 = vpop.f32.mrb[0].mxu0
    %v153 = vadd.f32 0.0, %v152
    %v154 = vpop.f32.mrb[0].mxu0
    %v155 = vpop.f32.mrb[0].mxu0
    %v156 = vpop.f32.mrb[0].mxu0
    %157 = vdwg.mxu0
    %v158 = vadd.f32 %v106, %v153
    %160 = vrot.lane.b32.xlu0 %v33, 112
    %v161 = vpop.permute.xlu0 %160
    %163 = vmatprep.subr.bf16.mxu0 0
    %164 = vmatpush1.bf16.msra.mxu0 %v161
    %165 = vmatprep.subr.bf16.mxu0 0
    %166 = vmatpush1.bf16.msra.mxu0 0
    %167 = vmatprep.subr.bf16.mxu0 0
    %168 = vmatpush1.bf16.msra.mxu0 0
    %169 = vmatprep.subr.bf16.mxu0 0
    %170 = vmatpush1.bf16.msra.mxu0 0
    %171 = vmatprep.subr.bf16.mxu0 0
    %172 = vmatpush1.bf16.msra.mxu0 0
    %173 = vmatprep.subr.bf16.mxu0 0
    %174 = vmatpush1.bf16.msra.mxu0 0
    %175 = vmatprep.subr.bf16.mxu0 0
    %176 = vmatpush1.bf16.msra.mxu0 0
    %177 = vmatprep.subr.bf16.mxu0 0
    %178 = vmatpush1.bf16.msra.mxu0 0
    %179 = vmatprep.subr.bf16.mxu0 0
    %180 = vmatpush1.bf16.msra.mxu0 0
    %181 = vmatprep.subr.bf16.mxu0 0
    %182 = vmatpush1.bf16.msra.mxu0 0
    %183 = vmatprep.subr.bf16.mxu0 0
    %184 = vmatpush1.bf16.msra.mxu0 0
    %185 = vmatprep.subr.bf16.mxu0 0
    %186 = vmatpush1.bf16.msra.mxu0 0
    %187 = vmatprep.subr.bf16.mxu0 0
    %188 = vmatpush1.bf16.msra.mxu0 0
    %189 = vmatprep.subr.bf16.mxu0 0
    %190 = vmatpush1.bf16.msra.mxu0 0
    %191 = vmatprep.subr.bf16.mxu0 0
    %192 = vmatpush1.bf16.msra.mxu0 0
    %193 = vmatprep.subr.bf16.mxu0 0
    %194 = vmatpush1.bf16.msra.mxu0 0
    %195 = vmatprep.mubr.bf16.mxu0 0
    %196 = vmatmul.mubr.bf16.gmra.mrb[0].mxu0 %v116
    %v197 = vpop.f32.mrb[0].mxu0
    %v198 = vadd.f32 0.0, %v197
    %v199 = vpop.f32.mrb[0].mxu0
    %v200 = vpop.f32.mrb[0].mxu0
    %v201 = vpop.f32.mrb[0].mxu0
    %202 = vdwg.mxu0
    %204 = vrot.lane.b32.xlu0 %v198, 16
    %v205 = vpop.permute.xlu0 %204
    %v207 = vadd.f32 %v106, %v205
    %208 = vrot.lane.b32.xlu0 %v33, 96
    %v209 = vpop.permute.xlu0 %208
    %211 = vmatprep.subr.bf16.mxu0 0
    %212 = vmatpush1.bf16.msra.mxu0 %v209
    %213 = vmatprep.subr.bf16.mxu0 0
    %214 = vmatpush1.bf16.msra.mxu0 0
    %215 = vmatprep.subr.bf16.mxu0 0
    %216 = vmatpush1.bf16.msra.mxu0 0
    %217 = vmatprep.subr.bf16.mxu0 0
    %218 = vmatpush1.bf16.msra.mxu0 0
    %219 = vmatprep.subr.bf16.mxu0 0
    %220 = vmatpush1.bf16.msra.mxu0 0
    %221 = vmatprep.subr.bf16.mxu0 0
    %222 = vmatpush1.bf16.msra.mxu0 0
    %223 = vmatprep.subr.bf16.mxu0 0
    %224 = vmatpush1.bf16.msra.mxu0 0
    %225 = vmatprep.subr.bf16.mxu0 0
    %226 = vmatpush1.bf16.msra.mxu0 0
    %227 = vmatprep.subr.bf16.mxu0 0
    %228 = vmatpush1.bf16.msra.mxu0 0
    %229 = vmatprep.subr.bf16.mxu0 0
    %230 = vmatpush1.bf16.msra.mxu0 0
    %231 = vmatprep.subr.bf16.mxu0 0
    %232 = vmatpush1.bf16.msra.mxu0 0
    %233 = vmatprep.subr.bf16.mxu0 0
    %234 = vmatpush1.bf16.msra.mxu0 0
    %235 = vmatprep.subr.bf16.mxu0 0
    %236 = vmatpush1.bf16.msra.mxu0 0
    %237 = vmatprep.subr.bf16.mxu0 0
    %238 = vmatpush1.bf16.msra.mxu0 0
    %239 = vmatprep.subr.bf16.mxu0 0
    %240 = vmatpush1.bf16.msra.mxu0 0
    %241 = vmatprep.subr.bf16.mxu0 0
    %242 = vmatpush1.bf16.msra.mxu0 0
    %243 = vmatprep.mubr.bf16.mxu0 0
    %244 = vmatmul.mubr.bf16.gmra.mrb[0].mxu0 %v116
    %v245 = vpop.f32.mrb[0].mxu0
    %v246 = vadd.f32 0.0, %v245
    %v247 = vpop.f32.mrb[0].mxu0
    %v248 = vpop.f32.mrb[0].mxu0
    %v249 = vpop.f32.mrb[0].mxu0
    %250 = vdwg.mxu0
    %252 = vrot.lane.b32.xlu0 %v246, 32
    %v253 = vpop.permute.xlu0 %252
    %v255 = vadd.f32 %v106, %v253
    %256 = vrot.lane.b32.xlu0 %v33, 80
    %v257 = vpop.permute.xlu0 %256
    %259 = vmatprep.subr.bf16.mxu0 0
    %260 = vmatpush1.bf16.msra.mxu0 %v257
    %261 = vmatprep.subr.bf16.mxu0 0
    %262 = vmatpush1.bf16.msra.mxu0 0
    %263 = vmatprep.subr.bf16.mxu0 0
    %264 = vmatpush1.bf16.msra.mxu0 0
    %265 = vmatprep.subr.bf16.mxu0 0
    %266 = vmatpush1.bf16.msra.mxu0 0
    %267 = vmatprep.subr.bf16.mxu0 0
    %268 = vmatpush1.bf16.msra.mxu0 0
    %269 = vmatprep.subr.bf16.mxu0 0
    %270 = vmatpush1.bf16.msra.mxu0 0
    %271 = vmatprep.subr.bf16.mxu0 0
    %272 = vmatpush1.bf16.msra.mxu0 0
    %273 = vmatprep.subr.bf16.mxu0 0
    %274 = vmatpush1.bf16.msra.mxu0 0
    %275 = vmatprep.subr.bf16.mxu0 0
    %276 = vmatpush1.bf16.msra.mxu0 0
    %277 = vmatprep.subr.bf16.mxu0 0
    %278 = vmatpush1.bf16.msra.mxu0 0
    %279 = vmatprep.subr.bf16.mxu0 0
    %280 = vmatpush1.bf16.msra.mxu0 0
    %281 = vmatprep.subr.bf16.mxu0 0
    %282 = vmatpush1.bf16.msra.mxu0 0
    %283 = vmatprep.subr.bf16.mxu0 0
    %284 = vmatpush1.bf16.msra.mxu0 0
    %285 = vmatprep.subr.bf16.mxu0 0
    %286 = vmatpush1.bf16.msra.mxu0 0
    %287 = vmatprep.subr.bf16.mxu0 0
    %288 = vmatpush1.bf16.msra.mxu0 0
    %289 = vmatprep.subr.bf16.mxu0 0
    %290 = vmatpush1.bf16.msra.mxu0 0
    %291 = vmatprep.mubr.bf16.mxu0 0
    %292 = vmatmul.mubr.bf16.gmra.mrb[0].mxu0 %v116
    %v293 = vpop.f32.mrb[0].mxu0
    %v294 = vadd.f32 0.0, %v293
    %v295 = vpop.f32.mrb[0].mxu0
    %v296 = vpop.f32.mrb[0].mxu0
    %v297 = vpop.f32.mrb[0].mxu0
    %298 = vdwg.mxu0
    %300 = vrot.lane.b32.xlu0 %v294, 48
    %v301 = vpop.permute.xlu0 %300
    %v303 = vadd.f32 %v106, %v301
    %v304 = vtanh.pop %v158
    %v305 = vmul.f32 %v304, 0.5
    %v306 = vadd.f32 %v305, 0.5
    %v307 = vtanh.pop %v207
    %v308 = vmul.f32 %v307, 0.5
    %v309 = vadd.f32 %v308, 0.5
    %v310 = vtanh.pop %v303
    %v311 = vmul.f32 %v310, 0.5
    %v312 = vadd.f32 %v311, 0.5
    %v313 = vtanh.pop %v255
    %v314 = vmul.f32 %v309, 0.0
    %316 = vrot.lane.b32.xlu0 %v313, 96
    %v317 = vpop.permute.xlu0 %316
    %v319 = vmul.f32 %v306, %v317
    %321 = vrot.lane.b32.xlu0 %v319, 16
    %v322 = vpop.permute.xlu0 %321
    %v324 = vadd.f32 %v314, %v322
    %v325 = vtanh.pop %v324
    %327 = vrot.lane.b32.xlu0 %v325, 32
    %v328 = vpop.permute.xlu0 %327
    %v330 = vmul.f32 %v312, %v328
    %v331 = vpack.c.bf16 %v330, %v330
    %333 = vrot.lane.b32.xlu0 %v331, 80
    %v334 = vpop.permute.xlu0 %333
    %v336 = vsel %vm114, %v334, 0
    %338 = vmatprep.subr.bf16.mxu0 0
    %339 = vmatpush1.bf16.msra.mxu0 %v33
    %340 = vmatprep.subr.bf16.mxu0 0
    %341 = vmatpush1.bf16.msra.mxu0 0
    %342 = vmatprep.subr.bf16.mxu0 0
    %343 = vmatpush1.bf16.msra.mxu0 0
    %344 = vmatprep.subr.bf16.mxu0 0
    %345 = vmatpush1.bf16.msra.mxu0 0
    %346 = vmatprep.subr.bf16.mxu0 0
    %347 = vmatpush1.bf16.msra.mxu0 0
    %348 = vmatprep.subr.bf16.mxu0 0
    %349 = vmatpush1.bf16.msra.mxu0 0
    %350 = vmatprep.subr.bf16.mxu0 0
    %351 = vmatpush1.bf16.msra.mxu0 0
    %352 = vmatprep.subr.bf16.mxu0 0
    %353 = vmatpush1.bf16.msra.mxu0 0
    %354 = vmatprep.subr.bf16.mxu0 0
    %355 = vmatpush1.bf16.msra.mxu0 0
    %356 = vmatprep.subr.bf16.mxu0 0
    %357 = vmatpush1.bf16.msra.mxu0 0
    %358 = vmatprep.subr.bf16.mxu0 0
    %359 = vmatpush1.bf16.msra.mxu0 0
    %360 = vmatprep.subr.bf16.mxu0 0
    %361 = vmatpush1.bf16.msra.mxu0 0
    %362 = vmatprep.subr.bf16.mxu0 0
    %363 = vmatpush1.bf16.msra.mxu0 0
    %364 = vmatprep.subr.bf16.mxu0 0
    %365 = vmatpush1.bf16.msra.mxu0 0
    %366 = vmatprep.subr.bf16.mxu0 0
    %367 = vmatpush1.bf16.msra.mxu0 0
    %368 = vmatprep.subr.bf16.mxu0 0
    %369 = vmatpush1.bf16.msra.mxu0 0
    %370 = vmatprep.mubr.bf16.mxu0 0
    %371 = vmatmul.mubr.bf16.gmra.mrb[0].mxu0 %v336
    %v372 = vpop.f32.mrb[0].mxu0
    %v373 = vadd.f32 0.0, %v372
    %v374 = vpop.f32.mrb[0].mxu0
    %v375 = vpop.f32.mrb[0].mxu0
    %v376 = vpop.f32.mrb[0].mxu0
    %377 = vdwg.mxu0
    %v378 = vadd.f32 %v107, %v373
    %379 = vmatprep.subr.bf16.mxu0 0
    %380 = vmatpush1.bf16.msra.mxu0 %v161
    %381 = vmatprep.subr.bf16.mxu0 0
    %382 = vmatpush1.bf16.msra.mxu0 0
    %383 = vmatprep.subr.bf16.mxu0 0
    %384 = vmatpush1.bf16.msra.mxu0 0
    %385 = vmatprep.subr.bf16.mxu0 0
    %386 = vmatpush1.bf16.msra.mxu0 0
    %387 = vmatprep.subr.bf16.mxu0 0
    %388 = vmatpush1.bf16.msra.mxu0 0
    %389 = vmatprep.subr.bf16.mxu0 0
    %390 = vmatpush1.bf16.msra.mxu0 0
    %391 = vmatprep.subr.bf16.mxu0 0
    %392 = vmatpush1.bf16.msra.mxu0 0
    %393 = vmatprep.subr.bf16.mxu0 0
    %394 = vmatpush1.bf16.msra.mxu0 0
    %395 = vmatprep.subr.bf16.mxu0 0
    %396 = vmatpush1.bf16.msra.mxu0 0
    %397 = vmatprep.subr.bf16.mxu0 0
    %398 = vmatpush1.bf16.msra.mxu0 0
    %399 = vmatprep.subr.bf16.mxu0 0
    %400 = vmatpush1.bf16.msra.mxu0 0
    %401 = vmatprep.subr.bf16.mxu0 0
    %402 = vmatpush1.bf16.msra.mxu0 0
    %403 = vmatprep.subr.bf16.mxu0 0
    %404 = vmatpush1.bf16.msra.mxu0 0
    %405 = vmatprep.subr.bf16.mxu0 0
    %406 = vmatpush1.bf16.msra.mxu0 0
    %407 = vmatprep.subr.bf16.mxu0 0
    %408 = vmatpush1.bf16.msra.mxu0 0
    %409 = vmatprep.subr.bf16.mxu0 0
    %410 = vmatpush1.bf16.msra.mxu0 0
    %411 = vmatprep.mubr.bf16.mxu0 0
    %412 = vmatmul.mubr.bf16.gmra.mrb[0].mxu0 %v336
    %v413 = vpop.f32.mrb[0].mxu0
    %v414 = vadd.f32 0.0, %v413
    %v415 = vpop.f32.mrb[0].mxu0
    %v416 = vpop.f32.mrb[0].mxu0
    %v417 = vpop.f32.mrb[0].mxu0
    %418 = vdwg.mxu0
    %420 = vrot.lane.b32.xlu0 %v414, 16
    %v421 = vpop.permute.xlu0 %420
    %v423 = vadd.f32 %v107, %v421
    %424 = vmatprep.subr.bf16.mxu0 0
    %425 = vmatpush1.bf16.msra.mxu0 %v209
    %426 = vmatprep.subr.bf16.mxu0 0
    %427 = vmatpush1.bf16.msra.mxu0 0
    %428 = vmatprep.subr.bf16.mxu0 0
    %429 = vmatpush1.bf16.msra.mxu0 0
    %430 = vmatprep.subr.bf16.mxu0 0
    %431 = vmatpush1.bf16.msra.mxu0 0
    %432 = vmatprep.subr.bf16.mxu0 0
    %433 = vmatpush1.bf16.msra.mxu0 0
    %434 = vmatprep.subr.bf16.mxu0 0
    %435 = vmatpush1.bf16.msra.mxu0 0
    %436 = vmatprep.subr.bf16.mxu0 0
    %437 = vmatpush1.bf16.msra.mxu0 0
    %438 = vmatprep.subr.bf16.mxu0 0
    %439 = vmatpush1.bf16.msra.mxu0 0
    %440 = vmatprep.subr.bf16.mxu0 0
    %441 = vmatpush1.bf16.msra.mxu0 0
    %442 = vmatprep.subr.bf16.mxu0 0
    %443 = vmatpush1.bf16.msra.mxu0 0
    %444 = vmatprep.subr.bf16.mxu0 0
    %445 = vmatpush1.bf16.msra.mxu0 0
    %446 = vmatprep.subr.bf16.mxu0 0
    %447 = vmatpush1.bf16.msra.mxu0 0
    %448 = vmatprep.subr.bf16.mxu0 0
    %449 = vmatpush1.bf16.msra.mxu0 0
    %450 = vmatprep.subr.bf16.mxu0 0
    %451 = vmatpush1.bf16.msra.mxu0 0
    %452 = vmatprep.subr.bf16.mxu0 0
    %453 = vmatpush1.bf16.msra.mxu0 0
    %454 = vmatprep.subr.bf16.mxu0 0
    %455 = vmatpush1.bf16.msra.mxu0 0
    %456 = vmatprep.mubr.bf16.mxu0 0
    %457 = vmatmul.mubr.bf16.gmra.mrb[0].mxu0 %v336
    %v458 = vpop.f32.mrb[0].mxu0
    %v459 = vadd.f32 0.0, %v458
    %v460 = vpop.f32.mrb[0].mxu0
    %v461 = vpop.f32.mrb[0].mxu0
    %v462 = vpop.f32.mrb[0].mxu0
    %463 = vdwg.mxu0
    %465 = vrot.lane.b32.xlu0 %v459, 32
    %v466 = vpop.permute.xlu0 %465
    %v468 = vadd.f32 %v107, %v466
    %469 = vmatprep.subr.bf16.mxu0 0
    %470 = vmatpush1.bf16.msra.mxu0 %v257
    %471 = vmatprep.subr.bf16.mxu0 0
    %472 = vmatpush1.bf16.msra.mxu0 0
    %473 = vmatprep.subr.bf16.mxu0 0
    %474 = vmatpush1.bf16.msra.mxu0 0
    %475 = vmatprep.subr.bf16.mxu0 0
    %476 = vmatpush1.bf16.msra.mxu0 0
    %477 = vmatprep.subr.bf16.mxu0 0
    %478 = vmatpush1.bf16.msra.mxu0 0
    %479 = vmatprep.subr.bf16.mxu0 0
    %480 = vmatpush1.bf16.msra.mxu0 0
    %481 = vmatprep.subr.bf16.mxu0 0
    %482 = vmatpush1.bf16.msra.mxu0 0
    %483 = vmatprep.subr.bf16.mxu0 0
    %484 = vmatpush1.bf16.msra.mxu0 0
    %485 = vmatprep.subr.bf16.mxu0 0
    %486 = vmatpush1.bf16.msra.mxu0 0
    %487 = vmatprep.subr.bf16.mxu0 0
    %488 = vmatpush1.bf16.msra.mxu0 0
    %489 = vmatprep.subr.bf16.mxu0 0
    %490 = vmatpush1.bf16.msra.mxu0 0
    %491 = vmatprep.subr.bf16.mxu0 0
    %492 = vmatpush1.bf16.msra.mxu0 0
    %493 = vmatprep.subr.bf16.mxu0 0
    %494 = vmatpush1.bf16.msra.mxu0 0
    %495 = vmatprep.subr.bf16.mxu0 0
    %496 = vmatpush1.bf16.msra.mxu0 0
    %497 = vmatprep.subr.bf16.mxu0 0
    %498 = vmatpush1.bf16.msra.mxu0 0
    %499 = vmatprep.subr.bf16.mxu0 0
    %500 = vmatpush1.bf16.msra.mxu0 0
    %501 = vmatprep.mubr.bf16.mxu0 0
    %502 = vmatmul.mubr.bf16.gmra.mrb[0].mxu0 %v336
    %v503 = vpop.f32.mrb[0].mxu0
    %v504 = vadd.f32 0.0, %v503
    %v505 = vpop.f32.mrb[0].mxu0
    %v506 = vpop.f32.mrb[0].mxu0
    %v507 = vpop.f32.mrb[0].mxu0
    %508 = vdwg.mxu0
    %510 = vrot.lane.b32.xlu0 %v504, 48
    %v511 = vpop.permute.xlu0 %510
    %v513 = vadd.f32 %v107, %v511
    %v514 = vtanh.pop %v378
    %v515 = vmul.f32 %v514, 0.5
    %v516 = vadd.f32 %v515, 0.5
    %v517 = vtanh.pop %v423
    %v518 = vmul.f32 %v517, 0.5
    %v519 = vadd.f32 %v518, 0.5
    %v520 = vtanh.pop %v513
    %v521 = vmul.f32 %v520, 0.5
    %v522 = vadd.f32 %v521, 0.5
    %v523 = vtanh.pop %v468
    %v524 = vmul.f32 %v519, %v324
    %526 = vrot.lane.b32.xlu0 %v523, 96
    %v527 = vpop.permute.xlu0 %526
    %v529 = vmul.f32 %v516, %v527
    %531 = vrot.lane.b32.xlu0 %v529, 16
    %v532 = vpop.permute.xlu0 %531
    %v534 = vadd.f32 %v524, %v532
    %v535 = vtanh.pop %v534
    %537 = vrot.lane.b32.xlu0 %v535, 32
    %v538 = vpop.permute.xlu0 %537
    %v540 = vmul.f32 %v522, %v538
    %v541 = vpack.c.bf16 %v540, %v540
    %543 = vrot.lane.b32.xlu0 %v541, 80
    %v544 = vpop.permute.xlu0 %543
    %v546 = vsel %vm114, %v544, 0
    %548 = vmatprep.subr.bf16.mxu0 0
    %549 = vmatpush1.bf16.msra.mxu0 %v33
    %550 = vmatprep.subr.bf16.mxu0 0
    %551 = vmatpush1.bf16.msra.mxu0 0
    %552 = vmatprep.subr.bf16.mxu0 0
    %553 = vmatpush1.bf16.msra.mxu0 0
    %554 = vmatprep.subr.bf16.mxu0 0
    %555 = vmatpush1.bf16.msra.mxu0 0
    %556 = vmatprep.subr.bf16.mxu0 0
    %557 = vmatpush1.bf16.msra.mxu0 0
    %558 = vmatprep.subr.bf16.mxu0 0
    %559 = vmatpush1.bf16.msra.mxu0 0
    %560 = vmatprep.subr.bf16.mxu0 0
    %561 = vmatpush1.bf16.msra.mxu0 0
    %562 = vmatprep.subr.bf16.mxu0 0
    %563 = vmatpush1.bf16.msra.mxu0 0
    %564 = vmatprep.subr.bf16.mxu0 0
    %565 = vmatpush1.bf16.msra.mxu0 0
    %566 = vmatprep.subr.bf16.mxu0 0
    %567 = vmatpush1.bf16.msra.mxu0 0
    %568 = vmatprep.subr.bf16.mxu0 0
    %569 = vmatpush1.bf16.msra.mxu0 0
    %570 = vmatprep.subr.bf16.mxu0 0
    %571 = vmatpush1.bf16.msra.mxu0 0
    %572 = vmatprep.subr.bf16.mxu0 0
    %573 = vmatpush1.bf16.msra.mxu0 0
    %574 = vmatprep.subr.bf16.mxu0 0
    %575 = vmatpush1.bf16.msra.mxu0 0
    %576 = vmatprep.subr.bf16.mxu0 0
    %577 = vmatpush1.bf16.msra.mxu0 0
    %578 = vmatprep.subr.bf16.mxu0 0
    %579 = vmatpush1.bf16.msra.mxu0 0
    %580 = vmatprep.mubr.bf16.mxu0 0
    %581 = vmatmul.mubr.bf16.gmra.mrb[0].mxu0 %v546
    %v582 = vpop.f32.mrb[0].mxu0
    %v583 = vadd.f32 0.0, %v582
    %v584 = vpop.f32.mrb[0].mxu0
    %v585 = vpop.f32.mrb[0].mxu0
    %v586 = vpop.f32.mrb[0].mxu0
    %587 = vdwg.mxu0
    %v588 = vadd.f32 %v108, %v583
    %589 = vmatprep.subr.bf16.mxu0 0
    %590 = vmatpush1.bf16.msra.mxu0 %v161
    %591 = vmatprep.subr.bf16.mxu0 0
    %592 = vmatpush1.bf16.msra.mxu0 0
    %593 = vmatprep.subr.bf16.mxu0 0
    %594 = vmatpush1.bf16.msra.mxu0 0
    %595 = vmatprep.subr.bf16.mxu0 0
    %596 = vmatpush1.bf16.msra.mxu0 0
    %597 = vmatprep.subr.bf16.mxu0 0
    %598 = vmatpush1.bf16.msra.mxu0 0
    %599 = vmatprep.subr.bf16.mxu0 0
    %600 = vmatpush1.bf16.msra.mxu0 0
    %601 = vmatprep.subr.bf16.mxu0 0
    %602 = vmatpush1.bf16.msra.mxu0 0
    %603 = vmatprep.subr.bf16.mxu0 0
    %604 = vmatpush1.bf16.msra.mxu0 0
    %605 = vmatprep.subr.bf16.mxu0 0
    %606 = vmatpush1.bf16.msra.mxu0 0
    %607 = vmatprep.subr.bf16.mxu0 0
    %608 = vmatpush1.bf16.msra.mxu0 0
    %609 = vmatprep.subr.bf16.mxu0 0
    %610 = vmatpush1.bf16.msra.mxu0 0
    %611 = vmatprep.subr.bf16.mxu0 0
    %612 = vmatpush1.bf16.msra.mxu0 0
    %613 = vmatprep.subr.bf16.mxu0 0
    %614 = vmatpush1.bf16.msra.mxu0 0
    %615 = vmatprep.subr.bf16.mxu0 0
    %616 = vmatpush1.bf16.msra.mxu0 0
    %617 = vmatprep.subr.bf16.mxu0 0
    %618 = vmatpush1.bf16.msra.mxu0 0
    %619 = vmatprep.subr.bf16.mxu0 0
    %620 = vmatpush1.bf16.msra.mxu0 0
    %621 = vmatprep.mubr.bf16.mxu0 0
    %622 = vmatmul.mubr.bf16.gmra.mrb[0].mxu0 %v546
    %v623 = vpop.f32.mrb[0].mxu0
    %v624 = vadd.f32 0.0, %v623
    %v625 = vpop.f32.mrb[0].mxu0
    %v626 = vpop.f32.mrb[0].mxu0
    %v627 = vpop.f32.mrb[0].mxu0
    %628 = vdwg.mxu0
    %630 = vrot.lane.b32.xlu0 %v624, 16
    %v631 = vpop.permute.xlu0 %630
    %v633 = vadd.f32 %v108, %v631
    %634 = vmatprep.subr.bf16.mxu0 0
    %635 = vmatpush1.bf16.msra.mxu0 %v209
    %636 = vmatprep.subr.bf16.mxu0 0
    %637 = vmatpush1.bf16.msra.mxu0 0
    %638 = vmatprep.subr.bf16.mxu0 0
    %639 = vmatpush1.bf16.msra.mxu0 0
    %640 = vmatprep.subr.bf16.mxu0 0
    %641 = vmatpush1.bf16.msra.mxu0 0
    %642 = vmatprep.subr.bf16.mxu0 0
    %643 = vmatpush1.bf16.msra.mxu0 0
    %644 = vmatprep.subr.bf16.mxu0 0
    %645 = vmatpush1.bf16.msra.mxu0 0
    %646 = vmatprep.subr.bf16.mxu0 0
    %647 = vmatpush1.bf16.msra.mxu0 0
    %648 = vmatprep.subr.bf16.mxu0 0
    %649 = vmatpush1.bf16.msra.mxu0 0
    %650 = vmatprep.subr.bf16.mxu0 0
    %651 = vmatpush1.bf16.msra.mxu0 0
    %652 = vmatprep.subr.bf16.mxu0 0
    %653 = vmatpush1.bf16.msra.mxu0 0
    %654 = vmatprep.subr.bf16.mxu0 0
    %655 = vmatpush1.bf16.msra.mxu0 0
    %656 = vmatprep.subr.bf16.mxu0 0
    %657 = vmatpush1.bf16.msra.mxu0 0
    %658 = vmatprep.subr.bf16.mxu0 0
    %659 = vmatpush1.bf16.msra.mxu0 0
    %660 = vmatprep.subr.bf16.mxu0 0
    %661 = vmatpush1.bf16.msra.mxu0 0
    %662 = vmatprep.subr.bf16.mxu0 0
    %663 = vmatpush1.bf16.msra.mxu0 0
    %664 = vmatprep.subr.bf16.mxu0 0
    %665 = vmatpush1.bf16.msra.mxu0 0
    %666 = vmatprep.mubr.bf16.mxu0 0
    %667 = vmatmul.mubr.bf16.gmra.mrb[0].mxu0 %v546
    %v668 = vpop.f32.mrb[0].mxu0
    %v669 = vadd.f32 0.0, %v668
    %v670 = vpop.f32.mrb[0].mxu0
    %v671 = vpop.f32.mrb[0].mxu0
    %v672 = vpop.f32.mrb[0].mxu0
    %673 = vdwg.mxu0
    %675 = vrot.lane.b32.xlu0 %v669, 32
    %v676 = vpop.permute.xlu0 %675
    %v678 = vadd.f32 %v108, %v676
    %679 = vmatprep.subr.bf16.mxu0 0
    %680 = vmatpush1.bf16.msra.mxu0 %v257
    %681 = vmatprep.subr.bf16.mxu0 0
    %682 = vmatpush1.bf16.msra.mxu0 0
    %683 = vmatprep.subr.bf16.mxu0 0
    %684 = vmatpush1.bf16.msra.mxu0 0
    %685 = vmatprep.subr.bf16.mxu0 0
    %686 = vmatpush1.bf16.msra.mxu0 0
    %687 = vmatprep.subr.bf16.mxu0 0
    %688 = vmatpush1.bf16.msra.mxu0 0
    %689 = vmatprep.subr.bf16.mxu0 0
    %690 = vmatpush1.bf16.msra.mxu0 0
    %691 = vmatprep.subr.bf16.mxu0 0
    %692 = vmatpush1.bf16.msra.mxu0 0
    %693 = vmatprep.subr.bf16.mxu0 0
    %694 = vmatpush1.bf16.msra.mxu0 0
    %695 = vmatprep.subr.bf16.mxu0 0
    %696 = vmatpush1.bf16.msra.mxu0 0
    %697 = vmatprep.subr.bf16.mxu0 0
    %698 = vmatpush1.bf16.msra.mxu0 0
    %699 = vmatprep.subr.bf16.mxu0 0
    %700 = vmatpush1.bf16.msra.mxu0 0
    %701 = vmatprep.subr.bf16.mxu0 0
    %702 = vmatpush1.bf16.msra.mxu0 0
    %703 = vmatprep.subr.bf16.mxu0 0
    %704 = vmatpush1.bf16.msra.mxu0 0
    %705 = vmatprep.subr.bf16.mxu0 0
    %706 = vmatpush1.bf16.msra.mxu0 0
    %707 = vmatprep.subr.bf16.mxu0 0
    %708 = vmatpush1.bf16.msra.mxu0 0
    %709 = vmatprep.subr.bf16.mxu0 0
    %710 = vmatpush1.bf16.msra.mxu0 0
    %711 = vmatprep.mubr.bf16.mxu0 0
    %712 = vmatmul.mubr.bf16.gmra.mrb[0].mxu0 %v546
    %v713 = vpop.f32.mrb[0].mxu0
    %v714 = vadd.f32 0.0, %v713
    %v715 = vpop.f32.mrb[0].mxu0
    %v716 = vpop.f32.mrb[0].mxu0
    %v717 = vpop.f32.mrb[0].mxu0
    %718 = vdwg.mxu0
    %720 = vrot.lane.b32.xlu0 %v714, 48
    %v721 = vpop.permute.xlu0 %720
    %v723 = vadd.f32 %v108, %v721
    %v724 = vtanh.pop %v588
    %v725 = vmul.f32 %v724, 0.5
    %v726 = vadd.f32 %v725, 0.5
    %v727 = vtanh.pop %v633
    %v728 = vmul.f32 %v727, 0.5
    %v729 = vadd.f32 %v728, 0.5
    %v730 = vtanh.pop %v723
    %v731 = vmul.f32 %v730, 0.5
    %v732 = vadd.f32 %v731, 0.5
    %v733 = vtanh.pop %v678
    %v734 = vmul.f32 %v729, %v534
    %736 = vrot.lane.b32.xlu0 %v733, 96
    %v737 = vpop.permute.xlu0 %736
    %v739 = vmul.f32 %v726, %v737
    %741 = vrot.lane.b32.xlu0 %v739, 16
    %v742 = vpop.permute.xlu0 %741
    %v744 = vadd.f32 %v734, %v742
    %v745 = vtanh.pop %v744
    %747 = vrot.lane.b32.xlu0 %v745, 32
    %v748 = vpop.permute.xlu0 %747
    %v750 = vmul.f32 %v732, %v748
    %v751 = vpack.c.bf16 %v750, %v750
    %753 = vrot.lane.b32.xlu0 %v751, 80
    %v754 = vpop.permute.xlu0 %753
    %v756 = vsel %vm114, %v754, 0
    %758 = vmatprep.subr.bf16.mxu0 0
    %759 = vmatpush1.bf16.msra.mxu0 %v33
    %760 = vmatprep.subr.bf16.mxu0 0
    %761 = vmatpush1.bf16.msra.mxu0 0
    %762 = vmatprep.subr.bf16.mxu0 0
    %763 = vmatpush1.bf16.msra.mxu0 0
    %764 = vmatprep.subr.bf16.mxu0 0
    %765 = vmatpush1.bf16.msra.mxu0 0
    %766 = vmatprep.subr.bf16.mxu0 0
    %767 = vmatpush1.bf16.msra.mxu0 0
    %768 = vmatprep.subr.bf16.mxu0 0
    %769 = vmatpush1.bf16.msra.mxu0 0
    %770 = vmatprep.subr.bf16.mxu0 0
    %771 = vmatpush1.bf16.msra.mxu0 0
    %772 = vmatprep.subr.bf16.mxu0 0
    %773 = vmatpush1.bf16.msra.mxu0 0
    %774 = vmatprep.subr.bf16.mxu0 0
    %775 = vmatpush1.bf16.msra.mxu0 0
    %776 = vmatprep.subr.bf16.mxu0 0
    %777 = vmatpush1.bf16.msra.mxu0 0
    %778 = vmatprep.subr.bf16.mxu0 0
    %779 = vmatpush1.bf16.msra.mxu0 0
    %780 = vmatprep.subr.bf16.mxu0 0
    %781 = vmatpush1.bf16.msra.mxu0 0
    %782 = vmatprep.subr.bf16.mxu0 0
    %783 = vmatpush1.bf16.msra.mxu0 0
    %784 = vmatprep.subr.bf16.mxu0 0
    %785 = vmatpush1.bf16.msra.mxu0 0
    %786 = vmatprep.subr.bf16.mxu0 0
    %787 = vmatpush1.bf16.msra.mxu0 0
    %788 = vmatprep.subr.bf16.mxu0 0
    %789 = vmatpush1.bf16.msra.mxu0 0
    %790 = vmatprep.mubr.bf16.mxu0 0
    %791 = vmatmul.mubr.bf16.gmra.mrb[0].mxu0 %v756
    %v792 = vpop.f32.mrb[0].mxu0
    %v793 = vadd.f32 0.0, %v792
    %v794 = vpop.f32.mrb[0].mxu0
    %v795 = vpop.f32.mrb[0].mxu0
    %v796 = vpop.f32.mrb[0].mxu0
    %797 = vdwg.mxu0
    %v798 = vadd.f32 %v109, %v793
    %799 = vmatprep.subr.bf16.mxu0 0
    %800 = vmatpush1.bf16.msra.mxu0 %v161
    %801 = vmatprep.subr.bf16.mxu0 0
    %802 = vmatpush1.bf16.msra.mxu0 0
    %803 = vmatprep.subr.bf16.mxu0 0
    %804 = vmatpush1.bf16.msra.mxu0 0
    %805 = vmatprep.subr.bf16.mxu0 0
    %806 = vmatpush1.bf16.msra.mxu0 0
    %807 = vmatprep.subr.bf16.mxu0 0
    %808 = vmatpush1.bf16.msra.mxu0 0
    %809 = vmatprep.subr.bf16.mxu0 0
    %810 = vmatpush1.bf16.msra.mxu0 0
    %811 = vmatprep.subr.bf16.mxu0 0
    %812 = vmatpush1.bf16.msra.mxu0 0
    %813 = vmatprep.subr.bf16.mxu0 0
    %814 = vmatpush1.bf16.msra.mxu0 0
    %815 = vmatprep.subr.bf16.mxu0 0
    %816 = vmatpush1.bf16.msra.mxu0 0
    %817 = vmatprep.subr.bf16.mxu0 0
    %818 = vmatpush1.bf16.msra.mxu0 0
    %819 = vmatprep.subr.bf16.mxu0 0
    %820 = vmatpush1.bf16.msra.mxu0 0
    %821 = vmatprep.subr.bf16.mxu0 0
    %822 = vmatpush1.bf16.msra.mxu0 0
    %823 = vmatprep.subr.bf16.mxu0 0
    %824 = vmatpush1.bf16.msra.mxu0 0
    %825 = vmatprep.subr.bf16.mxu0 0
    %826 = vmatpush1.bf16.msra.mxu0 0
    %827 = vmatprep.subr.bf16.mxu0 0
    %828 = vmatpush1.bf16.msra.mxu0 0
    %829 = vmatprep.subr.bf16.mxu0 0
    %830 = vmatpush1.bf16.msra.mxu0 0
    %831 = vmatprep.mubr.bf16.mxu0 0
    %832 = vmatmul.mubr.bf16.gmra.mrb[0].mxu0 %v756
    %v833 = vpop.f32.mrb[0].mxu0
    %v834 = vadd.f32 0.0, %v833
    %v835 = vpop.f32.mrb[0].mxu0
    %v836 = vpop.f32.mrb[0].mxu0
    %v837 = vpop.f32.mrb[0].mxu0
    %838 = vdwg.mxu0
    %840 = vrot.lane.b32.xlu0 %v834, 16
    %v841 = vpop.permute.xlu0 %840
    %v843 = vadd.f32 %v109, %v841
    %844 = vmatprep.subr.bf16.mxu0 0
    %845 = vmatpush1.bf16.msra.mxu0 %v209
    %846 = vmatprep.subr.bf16.mxu0 0
    %847 = vmatpush1.bf16.msra.mxu0 0
    %848 = vmatprep.subr.bf16.mxu0 0
    %849 = vmatpush1.bf16.msra.mxu0 0
    %850 = vmatprep.subr.bf16.mxu0 0
    %851 = vmatpush1.bf16.msra.mxu0 0
    %852 = vmatprep.subr.bf16.mxu0 0
    %853 = vmatpush1.bf16.msra.mxu0 0
    %854 = vmatprep.subr.bf16.mxu0 0
    %855 = vmatpush1.bf16.msra.mxu0 0
    %856 = vmatprep.subr.bf16.mxu0 0
    %857 = vmatpush1.bf16.msra.mxu0 0
    %858 = vmatprep.subr.bf16.mxu0 0
    %859 = vmatpush1.bf16.msra.mxu0 0
    %860 = vmatprep.subr.bf16.mxu0 0
    %861 = vmatpush1.bf16.msra.mxu0 0
    %862 = vmatprep.subr.bf16.mxu0 0
    %863 = vmatpush1.bf16.msra.mxu0 0
    %864 = vmatprep.subr.bf16.mxu0 0
    %865 = vmatpush1.bf16.msra.mxu0 0
    %866 = vmatprep.subr.bf16.mxu0 0
    %867 = vmatpush1.bf16.msra.mxu0 0
    %868 = vmatprep.subr.bf16.mxu0 0
    %869 = vmatpush1.bf16.msra.mxu0 0
    %870 = vmatprep.subr.bf16.mxu0 0
    %871 = vmatpush1.bf16.msra.mxu0 0
    %872 = vmatprep.subr.bf16.mxu0 0
    %873 = vmatpush1.bf16.msra.mxu0 0
    %874 = vmatprep.subr.bf16.mxu0 0
    %875 = vmatpush1.bf16.msra.mxu0 0
    %876 = vmatprep.mubr.bf16.mxu0 0
    %877 = vmatmul.mubr.bf16.gmra.mrb[0].mxu0 %v756
    %v878 = vpop.f32.mrb[0].mxu0
    %v879 = vadd.f32 0.0, %v878
    %v880 = vpop.f32.mrb[0].mxu0
    %v881 = vpop.f32.mrb[0].mxu0
    %v882 = vpop.f32.mrb[0].mxu0
    %883 = vdwg.mxu0
    %885 = vrot.lane.b32.xlu0 %v879, 32
    %v886 = vpop.permute.xlu0 %885
    %v888 = vadd.f32 %v109, %v886
    %889 = vmatprep.subr.bf16.mxu0 0
    %890 = vmatpush1.bf16.msra.mxu0 %v257
    %891 = vmatprep.subr.bf16.mxu0 0
    %892 = vmatpush1.bf16.msra.mxu0 0
    %893 = vmatprep.subr.bf16.mxu0 0
    %894 = vmatpush1.bf16.msra.mxu0 0
    %895 = vmatprep.subr.bf16.mxu0 0
    %896 = vmatpush1.bf16.msra.mxu0 0
    %897 = vmatprep.subr.bf16.mxu0 0
    %898 = vmatpush1.bf16.msra.mxu0 0
    %899 = vmatprep.subr.bf16.mxu0 0
    %900 = vmatpush1.bf16.msra.mxu0 0
    %901 = vmatprep.subr.bf16.mxu0 0
    %902 = vmatpush1.bf16.msra.mxu0 0
    %903 = vmatprep.subr.bf16.mxu0 0
    %904 = vmatpush1.bf16.msra.mxu0 0
    %905 = vmatprep.subr.bf16.mxu0 0
    %906 = vmatpush1.bf16.msra.mxu0 0
    %907 = vmatprep.subr.bf16.mxu0 0
    %908 = vmatpush1.bf16.msra.mxu0 0
    %909 = vmatprep.subr.bf16.mxu0 0
    %910 = vmatpush1.bf16.msra.mxu0 0
    %911 = vmatprep.subr.bf16.mxu0 0
    %912 = vmatpush1.bf16.msra.mxu0 0
    %913 = vmatprep.subr.bf16.mxu0 0
    %914 = vmatpush1.bf16.msra.mxu0 0
    %915 = vmatprep.subr.bf16.mxu0 0
    %916 = vmatpush1.bf16.msra.mxu0 0
    %917 = vmatprep.subr.bf16.mxu0 0
    %918 = vmatpush1.bf16.msra.mxu0 0
    %919 = vmatprep.subr.bf16.mxu0 0
    %920 = vmatpush1.bf16.msra.mxu0 0
    %921 = vmatprep.mubr.bf16.mxu0 0
    %922 = vmatmul.mubr.bf16.gmra.mrb[0].mxu0 %v756
    %v923 = vpop.f32.mrb[0].mxu0
    %v924 = vadd.f32 0.0, %v923
    %v925 = vpop.f32.mrb[0].mxu0
    %v926 = vpop.f32.mrb[0].mxu0
    %v927 = vpop.f32.mrb[0].mxu0
    %928 = vdwg.mxu0
    %930 = vrot.lane.b32.xlu0 %v924, 48
    %v931 = vpop.permute.xlu0 %930
    %v933 = vadd.f32 %v109, %v931
    %v934 = vtanh.pop %v798
    %v935 = vmul.f32 %v934, 0.5
    %v936 = vadd.f32 %v935, 0.5
    %v937 = vtanh.pop %v843
    %v938 = vmul.f32 %v937, 0.5
    %v939 = vadd.f32 %v938, 0.5
    %v940 = vtanh.pop %v933
    %v941 = vmul.f32 %v940, 0.5
    %v942 = vadd.f32 %v941, 0.5
    %v943 = vtanh.pop %v888
    %v944 = vmul.f32 %v939, %v744
    %946 = vrot.lane.b32.xlu0 %v943, 96
    %v947 = vpop.permute.xlu0 %946
    %v949 = vmul.f32 %v936, %v947
    %951 = vrot.lane.b32.xlu0 %v949, 16
    %v952 = vpop.permute.xlu0 %951
    %v954 = vadd.f32 %v944, %v952
    %v955 = vtanh.pop %v954
    %957 = vrot.lane.b32.xlu0 %v955, 32
    %v958 = vpop.permute.xlu0 %957
    %v960 = vmul.f32 %v942, %v958
    %v961 = vpack.c.bf16 %v960, %v960
    %963 = vrot.lane.b32.xlu0 %v961, 80
    %v964 = vpop.permute.xlu0 %963
    %v966 = vsel %vm114, %v964, 0
    %968 = vmatprep.subr.bf16.mxu0 0
    %969 = vmatpush1.bf16.msra.mxu0 %v33
    %970 = vmatprep.subr.bf16.mxu0 0
    %971 = vmatpush1.bf16.msra.mxu0 0
    %972 = vmatprep.subr.bf16.mxu0 0
    %973 = vmatpush1.bf16.msra.mxu0 0
    %974 = vmatprep.subr.bf16.mxu0 0
    %975 = vmatpush1.bf16.msra.mxu0 0
    %976 = vmatprep.subr.bf16.mxu0 0
    %977 = vmatpush1.bf16.msra.mxu0 0
    %978 = vmatprep.subr.bf16.mxu0 0
    %979 = vmatpush1.bf16.msra.mxu0 0
    %980 = vmatprep.subr.bf16.mxu0 0
    %981 = vmatpush1.bf16.msra.mxu0 0
    %982 = vmatprep.subr.bf16.mxu0 0
    %983 = vmatpush1.bf16.msra.mxu0 0
    %984 = vmatprep.subr.bf16.mxu0 0
    %985 = vmatpush1.bf16.msra.mxu0 0
    %986 = vmatprep.subr.bf16.mxu0 0
    %987 = vmatpush1.bf16.msra.mxu0 0
    %988 = vmatprep.subr.bf16.mxu0 0
    %989 = vmatpush1.bf16.msra.mxu0 0
    %990 = vmatprep.subr.bf16.mxu0 0
    %991 = vmatpush1.bf16.msra.mxu0 0
    %992 = vmatprep.subr.bf16.mxu0 0
    %993 = vmatpush1.bf16.msra.mxu0 0
    %994 = vmatprep.subr.bf16.mxu0 0
    %995 = vmatpush1.bf16.msra.mxu0 0
    %996 = vmatprep.subr.bf16.mxu0 0
    %997 = vmatpush1.bf16.msra.mxu0 0
    %998 = vmatprep.subr.bf16.mxu0 0
    %999 = vmatpush1.bf16.msra.mxu0 0
    %1000 = vmatprep.mubr.bf16.mxu0 0
    %1001 = vmatmul.mubr.bf16.gmra.mrb[0].mxu0 %v966
    %v1002 = vpop.f32.mrb[0].mxu0
    %v1003 = vadd.f32 0.0, %v1002
    %v1004 = vpop.f32.mrb[0].mxu0
    %v1005 = vpop.f32.mrb[0].mxu0
    %v1006 = vpop.f32.mrb[0].mxu0
    %1007 = vdwg.mxu0
    %v1008 = vadd.f32 %v110, %v1003
    %1009 = vmatprep.subr.bf16.mxu0 0
    %1010 = vmatpush1.bf16.msra.mxu0 %v161
    %1011 = vmatprep.subr.bf16.mxu0 0
    %1012 = vmatpush1.bf16.msra.mxu0 0
    %1013 = vmatprep.subr.bf16.mxu0 0
    %1014 = vmatpush1.bf16.msra.mxu0 0
    %1015 = vmatprep.subr.bf16.mxu0 0
    %1016 = vmatpush1.bf16.msra.mxu0 0
    %1017 = vmatprep.subr.bf16.mxu0 0
    %1018 = vmatpush1.bf16.msra.mxu0 0
    %1019 = vmatprep.subr.bf16.mxu0 0
    %1020 = vmatpush1.bf16.msra.mxu0 0
    %1021 = vmatprep.subr.bf16.mxu0 0
    %1022 = vmatpush1.bf16.msra.mxu0 0
    %1023 = vmatprep.subr.bf16.mxu0 0
    %1024 = vmatpush1.bf16.msra.mxu0 0
    %1025 = vmatprep.subr.bf16.mxu0 0
    %1026 = vmatpush1.bf16.msra.mxu0 0
    %1027 = vmatprep.subr.bf16.mxu0 0
    %1028 = vmatpush1.bf16.msra.mxu0 0
    %1029 = vmatprep.subr.bf16.mxu0 0
    %1030 = vmatpush1.bf16.msra.mxu0 0
    %1031 = vmatprep.subr.bf16.mxu0 0
    %1032 = vmatpush1.bf16.msra.mxu0 0
    %1033 = vmatprep.subr.bf16.mxu0 0
    %1034 = vmatpush1.bf16.msra.mxu0 0
    %1035 = vmatprep.subr.bf16.mxu0 0
    %1036 = vmatpush1.bf16.msra.mxu0 0
    %1037 = vmatprep.subr.bf16.mxu0 0
    %1038 = vmatpush1.bf16.msra.mxu0 0
    %1039 = vmatprep.subr.bf16.mxu0 0
    %1040 = vmatpush1.bf16.msra.mxu0 0
    %1041 = vmatprep.mubr.bf16.mxu0 0
    %1042 = vmatmul.mubr.bf16.gmra.mrb[0].mxu0 %v966
    %v1043 = vpop.f32.mrb[0].mxu0
    %v1044 = vadd.f32 0.0, %v1043
    %v1045 = vpop.f32.mrb[0].mxu0
    %v1046 = vpop.f32.mrb[0].mxu0
    %v1047 = vpop.f32.mrb[0].mxu0
    %1048 = vdwg.mxu0
    %1050 = vrot.lane.b32.xlu0 %v1044, 16
    %v1051 = vpop.permute.xlu0 %1050
    %v1053 = vadd.f32 %v110, %v1051
    %1054 = vmatprep.subr.bf16.mxu0 0
    %1055 = vmatpush1.bf16.msra.mxu0 %v209
    %1056 = vmatprep.subr.bf16.mxu0 0
    %1057 = vmatpush1.bf16.msra.mxu0 0
    %1058 = vmatprep.subr.bf16.mxu0 0
    %1059 = vmatpush1.bf16.msra.mxu0 0
    %1060 = vmatprep.subr.bf16.mxu0 0
    %1061 = vmatpush1.bf16.msra.mxu0 0
    %1062 = vmatprep.subr.bf16.mxu0 0
    %1063 = vmatpush1.bf16.msra.mxu0 0
    %1064 = vmatprep.subr.bf16.mxu0 0
    %1065 = vmatpush1.bf16.msra.mxu0 0
    %1066 = vmatprep.subr.bf16.mxu0 0
    %1067 = vmatpush1.bf16.msra.mxu0 0
    %1068 = vmatprep.subr.bf16.mxu0 0
    %1069 = vmatpush1.bf16.msra.mxu0 0
    %1070 = vmatprep.subr.bf16.mxu0 0
    %1071 = vmatpush1.bf16.msra.mxu0 0
    %1072 = vmatprep.subr.bf16.mxu0 0
    %1073 = vmatpush1.bf16.msra.mxu0 0
    %1074 = vmatprep.subr.bf16.mxu0 0
    %1075 = vmatpush1.bf16.msra.mxu0 0
    %1076 = vmatprep.subr.bf16.mxu0 0
    %1077 = vmatpush1.bf16.msra.mxu0 0
    %1078 = vmatprep.subr.bf16.mxu0 0
    %1079 = vmatpush1.bf16.msra.mxu0 0
    %1080 = vmatprep.subr.bf16.mxu0 0
    %1081 = vmatpush1.bf16.msra.mxu0 0
    %1082 = vmatprep.subr.bf16.mxu0 0
    %1083 = vmatpush1.bf16.msra.mxu0 0
    %1084 = vmatprep.subr.bf16.mxu0 0
    %1085 = vmatpush1.bf16.msra.mxu0 0
    %1086 = vmatprep.mubr.bf16.mxu0 0
    %1087 = vmatmul.mubr.bf16.gmra.mrb[0].mxu0 %v966
    %v1088 = vpop.f32.mrb[0].mxu0
    %v1089 = vadd.f32 0.0, %v1088
    %v1090 = vpop.f32.mrb[0].mxu0
    %v1091 = vpop.f32.mrb[0].mxu0
    %v1092 = vpop.f32.mrb[0].mxu0
    %1093 = vdwg.mxu0
    %1095 = vrot.lane.b32.xlu0 %v1089, 32
    %v1096 = vpop.permute.xlu0 %1095
    %v1098 = vadd.f32 %v110, %v1096
    %1099 = vmatprep.subr.bf16.mxu0 0
    %1100 = vmatpush1.bf16.msra.mxu0 %v257
    %1101 = vmatprep.subr.bf16.mxu0 0
    %1102 = vmatpush1.bf16.msra.mxu0 0
    %1103 = vmatprep.subr.bf16.mxu0 0
    %1104 = vmatpush1.bf16.msra.mxu0 0
    %1105 = vmatprep.subr.bf16.mxu0 0
    %1106 = vmatpush1.bf16.msra.mxu0 0
    %1107 = vmatprep.subr.bf16.mxu0 0
    %1108 = vmatpush1.bf16.msra.mxu0 0
    %1109 = vmatprep.subr.bf16.mxu0 0
    %1110 = vmatpush1.bf16.msra.mxu0 0
    %1111 = vmatprep.subr.bf16.mxu0 0
    %1112 = vmatpush1.bf16.msra.mxu0 0
    %1113 = vmatprep.subr.bf16.mxu0 0
    %1114 = vmatpush1.bf16.msra.mxu0 0
    %1115 = vmatprep.subr.bf16.mxu0 0
    %1116 = vmatpush1.bf16.msra.mxu0 0
    %1117 = vmatprep.subr.bf16.mxu0 0
    %1118 = vmatpush1.bf16.msra.mxu0 0
    %1119 = vmatprep.subr.bf16.mxu0 0
    %1120 = vmatpush1.bf16.msra.mxu0 0
    %1121 = vmatprep.subr.bf16.mxu0 0
    %1122 = vmatpush1.bf16.msra.mxu0 0
    %1123 = vmatprep.subr.bf16.mxu0 0
    %1124 = vmatpush1.bf16.msra.mxu0 0
    %1125 = vmatprep.subr.bf16.mxu0 0
    %1126 = vmatpush1.bf16.msra.mxu0 0
    %1127 = vmatprep.subr.bf16.mxu0 0
    %1128 = vmatpush1.bf16.msra.mxu0 0
    %1129 = vmatprep.subr.bf16.mxu0 0
    %1130 = vmatpush1.bf16.msra.mxu0 0
    %1131 = vmatprep.mubr.bf16.mxu0 0
    %1132 = vmatmul.mubr.bf16.gmra.mrb[0].mxu0 %v966
    %v1133 = vpop.f32.mrb[0].mxu0
    %v1134 = vadd.f32 0.0, %v1133
    %v1135 = vpop.f32.mrb[0].mxu0
    %v1136 = vpop.f32.mrb[0].mxu0
    %v1137 = vpop.f32.mrb[0].mxu0
    %1138 = vdwg.mxu0
    %1140 = vrot.lane.b32.xlu0 %v1134, 48
    %v1141 = vpop.permute.xlu0 %1140
    %v1143 = vadd.f32 %v110, %v1141
    %v1144 = vtanh.pop %v1008
    %v1145 = vmul.f32 %v1144, 0.5
    %v1146 = vadd.f32 %v1145, 0.5
    %v1147 = vtanh.pop %v1053
    %v1148 = vmul.f32 %v1147, 0.5
    %v1149 = vadd.f32 %v1148, 0.5
    %v1150 = vtanh.pop %v1143
    %v1151 = vmul.f32 %v1150, 0.5
    %v1152 = vadd.f32 %v1151, 0.5
    %v1153 = vtanh.pop %v1098
    %v1154 = vmul.f32 %v1149, %v954
    %1156 = vrot.lane.b32.xlu0 %v1153, 96
    %v1157 = vpop.permute.xlu0 %1156
    %v1159 = vmul.f32 %v1146, %v1157
    %1161 = vrot.lane.b32.xlu0 %v1159, 16
    %v1162 = vpop.permute.xlu0 %1161
    %v1164 = vadd.f32 %v1154, %v1162
    %v1165 = vtanh.pop %v1164
    %1167 = vrot.lane.b32.xlu0 %v1165, 32
    %v1168 = vpop.permute.xlu0 %1167
    %v1170 = vmul.f32 %v1152, %v1168
    %v1171 = vpack.c.bf16 %v1170, %v1170
    %1173 = vrot.lane.b32.xlu0 %v1171, 80
    %v1174 = vpop.permute.xlu0 %1173
    %v1176 = vsel %vm114, %v1174, 0
    %1178 = vmatprep.subr.bf16.mxu0 0
    %1179 = vmatpush1.bf16.msra.mxu0 %v33
    %1180 = vmatprep.subr.bf16.mxu0 0
    %1181 = vmatpush1.bf16.msra.mxu0 0
    %1182 = vmatprep.subr.bf16.mxu0 0
    %1183 = vmatpush1.bf16.msra.mxu0 0
    %1184 = vmatprep.subr.bf16.mxu0 0
    %1185 = vmatpush1.bf16.msra.mxu0 0
    %1186 = vmatprep.subr.bf16.mxu0 0
    %1187 = vmatpush1.bf16.msra.mxu0 0
    %1188 = vmatprep.subr.bf16.mxu0 0
    %1189 = vmatpush1.bf16.msra.mxu0 0
    %1190 = vmatprep.subr.bf16.mxu0 0
    %1191 = vmatpush1.bf16.msra.mxu0 0
    %1192 = vmatprep.subr.bf16.mxu0 0
    %1193 = vmatpush1.bf16.msra.mxu0 0
    %1194 = vmatprep.subr.bf16.mxu0 0
    %1195 = vmatpush1.bf16.msra.mxu0 0
    %1196 = vmatprep.subr.bf16.mxu0 0
    %1197 = vmatpush1.bf16.msra.mxu0 0
    %1198 = vmatprep.subr.bf16.mxu0 0
    %1199 = vmatpush1.bf16.msra.mxu0 0
    %1200 = vmatprep.subr.bf16.mxu0 0
    %1201 = vmatpush1.bf16.msra.mxu0 0
    %1202 = vmatprep.subr.bf16.mxu0 0
    %1203 = vmatpush1.bf16.msra.mxu0 0
    %1204 = vmatprep.subr.bf16.mxu0 0
    %1205 = vmatpush1.bf16.msra.mxu0 0
    %1206 = vmatprep.subr.bf16.mxu0 0
    %1207 = vmatpush1.bf16.msra.mxu0 0
    %1208 = vmatprep.subr.bf16.mxu0 0
    %1209 = vmatpush1.bf16.msra.mxu0 0
    %1210 = vmatprep.mubr.bf16.mxu0 0
    %1211 = vmatmul.mubr.bf16.gmra.mrb[0].mxu0 %v1176
    %v1212 = vpop.f32.mrb[0].mxu0
    %v1213 = vadd.f32 0.0, %v1212
    %v1214 = vpop.f32.mrb[0].mxu0
    %v1215 = vpop.f32.mrb[0].mxu0
    %v1216 = vpop.f32.mrb[0].mxu0
    %1217 = vdwg.mxu0
    %v1218 = vadd.f32 %v111, %v1213
    %1219 = vmatprep.subr.bf16.mxu0 0
    %1220 = vmatpush1.bf16.msra.mxu0 %v161
    %1221 = vmatprep.subr.bf16.mxu0 0
    %1222 = vmatpush1.bf16.msra.mxu0 0
    %1223 = vmatprep.subr.bf16.mxu0 0
    %1224 = vmatpush1.bf16.msra.mxu0 0
    %1225 = vmatprep.subr.bf16.mxu0 0
    %1226 = vmatpush1.bf16.msra.mxu0 0
    %1227 = vmatprep.subr.bf16.mxu0 0
    %1228 = vmatpush1.bf16.msra.mxu0 0
    %1229 = vmatprep.subr.bf16.mxu0 0
    %1230 = vmatpush1.bf16.msra.mxu0 0
    %1231 = vmatprep.subr.bf16.mxu0 0
    %1232 = vmatpush1.bf16.msra.mxu0 0
    %1233 = vmatprep.subr.bf16.mxu0 0
    %1234 = vmatpush1.bf16.msra.mxu0 0
    %1235 = vmatprep.subr.bf16.mxu0 0
    %1236 = vmatpush1.bf16.msra.mxu0 0
    %1237 = vmatprep.subr.bf16.mxu0 0
    %1238 = vmatpush1.bf16.msra.mxu0 0
    %1239 = vmatprep.subr.bf16.mxu0 0
    %1240 = vmatpush1.bf16.msra.mxu0 0
    %1241 = vmatprep.subr.bf16.mxu0 0
    %1242 = vmatpush1.bf16.msra.mxu0 0
    %1243 = vmatprep.subr.bf16.mxu0 0
    %1244 = vmatpush1.bf16.msra.mxu0 0
    %1245 = vmatprep.subr.bf16.mxu0 0
    %1246 = vmatpush1.bf16.msra.mxu0 0
    %1247 = vmatprep.subr.bf16.mxu0 0
    %1248 = vmatpush1.bf16.msra.mxu0 0
    %1249 = vmatprep.subr.bf16.mxu0 0
    %1250 = vmatpush1.bf16.msra.mxu0 0
    %1251 = vmatprep.mubr.bf16.mxu0 0
    %1252 = vmatmul.mubr.bf16.gmra.mrb[0].mxu0 %v1176
    %v1253 = vpop.f32.mrb[0].mxu0
    %v1254 = vadd.f32 0.0, %v1253
    %v1255 = vpop.f32.mrb[0].mxu0
    %v1256 = vpop.f32.mrb[0].mxu0
    %v1257 = vpop.f32.mrb[0].mxu0
    %1258 = vdwg.mxu0
    %1260 = vrot.lane.b32.xlu0 %v1254, 16
    %v1261 = vpop.permute.xlu0 %1260
    %v1263 = vadd.f32 %v111, %v1261
    %1264 = vmatprep.subr.bf16.mxu0 0
    %1265 = vmatpush1.bf16.msra.mxu0 %v209
    %1266 = vmatprep.subr.bf16.mxu0 0
    %1267 = vmatpush1.bf16.msra.mxu0 0
    %1268 = vmatprep.subr.bf16.mxu0 0
    %1269 = vmatpush1.bf16.msra.mxu0 0
    %1270 = vmatprep.subr.bf16.mxu0 0
    %1271 = vmatpush1.bf16.msra.mxu0 0
    %1272 = vmatprep.subr.bf16.mxu0 0
    %1273 = vmatpush1.bf16.msra.mxu0 0
    %1274 = vmatprep.subr.bf16.mxu0 0
    %1275 = vmatpush1.bf16.msra.mxu0 0
    %1276 = vmatprep.subr.bf16.mxu0 0
    %1277 = vmatpush1.bf16.msra.mxu0 0
    %1278 = vmatprep.subr.bf16.mxu0 0
    %1279 = vmatpush1.bf16.msra.mxu0 0
    %1280 = vmatprep.subr.bf16.mxu0 0
    %1281 = vmatpush1.bf16.msra.mxu0 0
    %1282 = vmatprep.subr.bf16.mxu0 0
    %1283 = vmatpush1.bf16.msra.mxu0 0
    %1284 = vmatprep.subr.bf16.mxu0 0
    %1285 = vmatpush1.bf16.msra.mxu0 0
    %1286 = vmatprep.subr.bf16.mxu0 0
    %1287 = vmatpush1.bf16.msra.mxu0 0
    %1288 = vmatprep.subr.bf16.mxu0 0
    %1289 = vmatpush1.bf16.msra.mxu0 0
    %1290 = vmatprep.subr.bf16.mxu0 0
    %1291 = vmatpush1.bf16.msra.mxu0 0
    %1292 = vmatprep.subr.bf16.mxu0 0
    %1293 = vmatpush1.bf16.msra.mxu0 0
    %1294 = vmatprep.subr.bf16.mxu0 0
    %1295 = vmatpush1.bf16.msra.mxu0 0
    %1296 = vmatprep.mubr.bf16.mxu0 0
    %1297 = vmatmul.mubr.bf16.gmra.mrb[0].mxu0 %v1176
    %v1298 = vpop.f32.mrb[0].mxu0
    %v1299 = vadd.f32 0.0, %v1298
    %v1300 = vpop.f32.mrb[0].mxu0
    %v1301 = vpop.f32.mrb[0].mxu0
    %v1302 = vpop.f32.mrb[0].mxu0
    %1303 = vdwg.mxu0
    %1305 = vrot.lane.b32.xlu0 %v1299, 32
    %v1306 = vpop.permute.xlu0 %1305
    %v1308 = vadd.f32 %v111, %v1306
    %1309 = vmatprep.subr.bf16.mxu0 0
    %1310 = vmatpush1.bf16.msra.mxu0 %v257
    %1311 = vmatprep.subr.bf16.mxu0 0
    %1312 = vmatpush1.bf16.msra.mxu0 0
    %1313 = vmatprep.subr.bf16.mxu0 0
    %1314 = vmatpush1.bf16.msra.mxu0 0
    %1315 = vmatprep.subr.bf16.mxu0 0
    %1316 = vmatpush1.bf16.msra.mxu0 0
    %1317 = vmatprep.subr.bf16.mxu0 0
    %1318 = vmatpush1.bf16.msra.mxu0 0
    %1319 = vmatprep.subr.bf16.mxu0 0
    %1320 = vmatpush1.bf16.msra.mxu0 0
    %1321 = vmatprep.subr.bf16.mxu0 0
    %1322 = vmatpush1.bf16.msra.mxu0 0
    %1323 = vmatprep.subr.bf16.mxu0 0
    %1324 = vmatpush1.bf16.msra.mxu0 0
    %1325 = vmatprep.subr.bf16.mxu0 0
    %1326 = vmatpush1.bf16.msra.mxu0 0
    %1327 = vmatprep.subr.bf16.mxu0 0
    %1328 = vmatpush1.bf16.msra.mxu0 0
    %1329 = vmatprep.subr.bf16.mxu0 0
    %1330 = vmatpush1.bf16.msra.mxu0 0
    %1331 = vmatprep.subr.bf16.mxu0 0
    %1332 = vmatpush1.bf16.msra.mxu0 0
    %1333 = vmatprep.subr.bf16.mxu0 0
    %1334 = vmatpush1.bf16.msra.mxu0 0
    %1335 = vmatprep.subr.bf16.mxu0 0
    %1336 = vmatpush1.bf16.msra.mxu0 0
    %1337 = vmatprep.subr.bf16.mxu0 0
    %1338 = vmatpush1.bf16.msra.mxu0 0
    %1339 = vmatprep.subr.bf16.mxu0 0
    %1340 = vmatpush1.bf16.msra.mxu0 0
    %1341 = vmatprep.mubr.bf16.mxu0 0
    %1342 = vmatmul.mubr.bf16.gmra.mrb[0].mxu0 %v1176
    %v1343 = vpop.f32.mrb[0].mxu0
    %v1344 = vadd.f32 0.0, %v1343
    %v1345 = vpop.f32.mrb[0].mxu0
    %v1346 = vpop.f32.mrb[0].mxu0
    %v1347 = vpop.f32.mrb[0].mxu0
    %1348 = vdwg.mxu0
    %1350 = vrot.lane.b32.xlu0 %v1344, 48
    %v1351 = vpop.permute.xlu0 %1350
    %v1353 = vadd.f32 %v111, %v1351
    %v1354 = vtanh.pop %v1218
    %v1355 = vmul.f32 %v1354, 0.5
    %v1356 = vadd.f32 %v1355, 0.5
    %v1357 = vtanh.pop %v1263
    %v1358 = vmul.f32 %v1357, 0.5
    %v1359 = vadd.f32 %v1358, 0.5
    %v1360 = vtanh.pop %v1353
    %v1361 = vmul.f32 %v1360, 0.5
    %v1362 = vadd.f32 %v1361, 0.5
    %v1363 = vtanh.pop %v1308
    %v1364 = vmul.f32 %v1359, %v1164
    %1366 = vrot.lane.b32.xlu0 %v1363, 96
    %v1367 = vpop.permute.xlu0 %1366
    %v1369 = vmul.f32 %v1356, %v1367
    %1371 = vrot.lane.b32.xlu0 %v1369, 16
    %v1372 = vpop.permute.xlu0 %1371
    %v1374 = vadd.f32 %v1364, %v1372
    %v1375 = vtanh.pop %v1374
    %1377 = vrot.lane.b32.xlu0 %v1375, 32
    %v1378 = vpop.permute.xlu0 %1377
    %v1380 = vmul.f32 %v1362, %v1378
    %v1381 = vpack.c.bf16 %v1380, %v1380
    %1383 = vrot.lane.b32.xlu0 %v1381, 80
    %v1384 = vpop.permute.xlu0 %1383
    %v1386 = vsel %vm114, %v1384, 0
    %1388 = vmatprep.subr.bf16.mxu0 0
    %1389 = vmatpush1.bf16.msra.mxu0 %v33
    %1390 = vmatprep.subr.bf16.mxu0 0
    %1391 = vmatpush1.bf16.msra.mxu0 0
    %1392 = vmatprep.subr.bf16.mxu0 0
    %1393 = vmatpush1.bf16.msra.mxu0 0
    %1394 = vmatprep.subr.bf16.mxu0 0
    %1395 = vmatpush1.bf16.msra.mxu0 0
    %1396 = vmatprep.subr.bf16.mxu0 0
    %1397 = vmatpush1.bf16.msra.mxu0 0
    %1398 = vmatprep.subr.bf16.mxu0 0
    %1399 = vmatpush1.bf16.msra.mxu0 0
    %1400 = vmatprep.subr.bf16.mxu0 0
    %1401 = vmatpush1.bf16.msra.mxu0 0
    %1402 = vmatprep.subr.bf16.mxu0 0
    %1403 = vmatpush1.bf16.msra.mxu0 0
    %1404 = vmatprep.subr.bf16.mxu0 0
    %1405 = vmatpush1.bf16.msra.mxu0 0
    %1406 = vmatprep.subr.bf16.mxu0 0
    %1407 = vmatpush1.bf16.msra.mxu0 0
    %1408 = vmatprep.subr.bf16.mxu0 0
    %1409 = vmatpush1.bf16.msra.mxu0 0
    %1410 = vmatprep.subr.bf16.mxu0 0
    %1411 = vmatpush1.bf16.msra.mxu0 0
    %1412 = vmatprep.subr.bf16.mxu0 0
    %1413 = vmatpush1.bf16.msra.mxu0 0
    %1414 = vmatprep.subr.bf16.mxu0 0
    %1415 = vmatpush1.bf16.msra.mxu0 0
    %1416 = vmatprep.subr.bf16.mxu0 0
    %1417 = vmatpush1.bf16.msra.mxu0 0
    %1418 = vmatprep.subr.bf16.mxu0 0
    %1419 = vmatpush1.bf16.msra.mxu0 0
    %1420 = vmatprep.mubr.bf16.mxu0 0
    %1421 = vmatmul.mubr.bf16.gmra.mrb[0].mxu0 %v1386
    %v1422 = vpop.f32.mrb[0].mxu0
    %v1423 = vadd.f32 0.0, %v1422
    %v1424 = vpop.f32.mrb[0].mxu0
    %v1425 = vpop.f32.mrb[0].mxu0
    %v1426 = vpop.f32.mrb[0].mxu0
    %1427 = vdwg.mxu0
    %v1428 = vadd.f32 %v112, %v1423
    %1429 = vmatprep.subr.bf16.mxu0 0
    %1430 = vmatpush1.bf16.msra.mxu0 %v161
    %1431 = vmatprep.subr.bf16.mxu0 0
    %1432 = vmatpush1.bf16.msra.mxu0 0
    %1433 = vmatprep.subr.bf16.mxu0 0
    %1434 = vmatpush1.bf16.msra.mxu0 0
    %1435 = vmatprep.subr.bf16.mxu0 0
    %1436 = vmatpush1.bf16.msra.mxu0 0
    %1437 = vmatprep.subr.bf16.mxu0 0
    %1438 = vmatpush1.bf16.msra.mxu0 0
    %1439 = vmatprep.subr.bf16.mxu0 0
    %1440 = vmatpush1.bf16.msra.mxu0 0
    %1441 = vmatprep.subr.bf16.mxu0 0
    %1442 = vmatpush1.bf16.msra.mxu0 0
    %1443 = vmatprep.subr.bf16.mxu0 0
    %1444 = vmatpush1.bf16.msra.mxu0 0
    %1445 = vmatprep.subr.bf16.mxu0 0
    %1446 = vmatpush1.bf16.msra.mxu0 0
    %1447 = vmatprep.subr.bf16.mxu0 0
    %1448 = vmatpush1.bf16.msra.mxu0 0
    %1449 = vmatprep.subr.bf16.mxu0 0
    %1450 = vmatpush1.bf16.msra.mxu0 0
    %1451 = vmatprep.subr.bf16.mxu0 0
    %1452 = vmatpush1.bf16.msra.mxu0 0
    %1453 = vmatprep.subr.bf16.mxu0 0
    %1454 = vmatpush1.bf16.msra.mxu0 0
    %1455 = vmatprep.subr.bf16.mxu0 0
    %1456 = vmatpush1.bf16.msra.mxu0 0
    %1457 = vmatprep.subr.bf16.mxu0 0
    %1458 = vmatpush1.bf16.msra.mxu0 0
    %1459 = vmatprep.subr.bf16.mxu0 0
    %1460 = vmatpush1.bf16.msra.mxu0 0
    %1461 = vmatprep.mubr.bf16.mxu0 0
    %1462 = vmatmul.mubr.bf16.gmra.mrb[0].mxu0 %v1386
    %v1463 = vpop.f32.mrb[0].mxu0
    %v1464 = vadd.f32 0.0, %v1463
    %v1465 = vpop.f32.mrb[0].mxu0
    %v1466 = vpop.f32.mrb[0].mxu0
    %v1467 = vpop.f32.mrb[0].mxu0
    %1468 = vdwg.mxu0
    %1470 = vrot.lane.b32.xlu0 %v1464, 16
    %v1471 = vpop.permute.xlu0 %1470
    %v1473 = vadd.f32 %v112, %v1471
    %1474 = vmatprep.subr.bf16.mxu0 0
    %1475 = vmatpush1.bf16.msra.mxu0 %v209
    %1476 = vmatprep.subr.bf16.mxu0 0
    %1477 = vmatpush1.bf16.msra.mxu0 0
    %1478 = vmatprep.subr.bf16.mxu0 0
    %1479 = vmatpush1.bf16.msra.mxu0 0
    %1480 = vmatprep.subr.bf16.mxu0 0
    %1481 = vmatpush1.bf16.msra.mxu0 0
    %1482 = vmatprep.subr.bf16.mxu0 0
    %1483 = vmatpush1.bf16.msra.mxu0 0
    %1484 = vmatprep.subr.bf16.mxu0 0
    %1485 = vmatpush1.bf16.msra.mxu0 0
    %1486 = vmatprep.subr.bf16.mxu0 0
    %1487 = vmatpush1.bf16.msra.mxu0 0
    %1488 = vmatprep.subr.bf16.mxu0 0
    %1489 = vmatpush1.bf16.msra.mxu0 0
    %1490 = vmatprep.subr.bf16.mxu0 0
    %1491 = vmatpush1.bf16.msra.mxu0 0
    %1492 = vmatprep.subr.bf16.mxu0 0
    %1493 = vmatpush1.bf16.msra.mxu0 0
    %1494 = vmatprep.subr.bf16.mxu0 0
    %1495 = vmatpush1.bf16.msra.mxu0 0
    %1496 = vmatprep.subr.bf16.mxu0 0
    %1497 = vmatpush1.bf16.msra.mxu0 0
    %1498 = vmatprep.subr.bf16.mxu0 0
    %1499 = vmatpush1.bf16.msra.mxu0 0
    %1500 = vmatprep.subr.bf16.mxu0 0
    %1501 = vmatpush1.bf16.msra.mxu0 0
    %1502 = vmatprep.subr.bf16.mxu0 0
    %1503 = vmatpush1.bf16.msra.mxu0 0
    %1504 = vmatprep.subr.bf16.mxu0 0
    %1505 = vmatpush1.bf16.msra.mxu0 0
    %1506 = vmatprep.mubr.bf16.mxu0 0
    %1507 = vmatmul.mubr.bf16.gmra.mrb[0].mxu0 %v1386
    %v1508 = vpop.f32.mrb[0].mxu0
    %v1509 = vadd.f32 0.0, %v1508
    %v1510 = vpop.f32.mrb[0].mxu0
    %v1511 = vpop.f32.mrb[0].mxu0
    %v1512 = vpop.f32.mrb[0].mxu0
    %1513 = vdwg.mxu0
    %1515 = vrot.lane.b32.xlu0 %v1509, 32
    %v1516 = vpop.permute.xlu0 %1515
    %v1518 = vadd.f32 %v112, %v1516
    %1519 = vmatprep.subr.bf16.mxu0 0
    %1520 = vmatpush1.bf16.msra.mxu0 %v257
    %1521 = vmatprep.subr.bf16.mxu0 0
    %1522 = vmatpush1.bf16.msra.mxu0 0
    %1523 = vmatprep.subr.bf16.mxu0 0
    %1524 = vmatpush1.bf16.msra.mxu0 0
    %1525 = vmatprep.subr.bf16.mxu0 0
    %1526 = vmatpush1.bf16.msra.mxu0 0
    %1527 = vmatprep.subr.bf16.mxu0 0
    %1528 = vmatpush1.bf16.msra.mxu0 0
    %1529 = vmatprep.subr.bf16.mxu0 0
    %1530 = vmatpush1.bf16.msra.mxu0 0
    %1531 = vmatprep.subr.bf16.mxu0 0
    %1532 = vmatpush1.bf16.msra.mxu0 0
    %1533 = vmatprep.subr.bf16.mxu0 0
    %1534 = vmatpush1.bf16.msra.mxu0 0
    %1535 = vmatprep.subr.bf16.mxu0 0
    %1536 = vmatpush1.bf16.msra.mxu0 0
    %1537 = vmatprep.subr.bf16.mxu0 0
    %1538 = vmatpush1.bf16.msra.mxu0 0
    %1539 = vmatprep.subr.bf16.mxu0 0
    %1540 = vmatpush1.bf16.msra.mxu0 0
    %1541 = vmatprep.subr.bf16.mxu0 0
    %1542 = vmatpush1.bf16.msra.mxu0 0
    %1543 = vmatprep.subr.bf16.mxu0 0
    %1544 = vmatpush1.bf16.msra.mxu0 0
    %1545 = vmatprep.subr.bf16.mxu0 0
    %1546 = vmatpush1.bf16.msra.mxu0 0
    %1547 = vmatprep.subr.bf16.mxu0 0
    %1548 = vmatpush1.bf16.msra.mxu0 0
    %1549 = vmatprep.subr.bf16.mxu0 0
    %1550 = vmatpush1.bf16.msra.mxu0 0
    %1551 = vmatprep.mubr.bf16.mxu0 0
    %1552 = vmatmul.mubr.bf16.gmra.mrb[0].mxu0 %v1386
    %v1553 = vpop.f32.mrb[0].mxu0
    %v1554 = vadd.f32 0.0, %v1553
    %v1555 = vpop.f32.mrb[0].mxu0
    %v1556 = vpop.f32.mrb[0].mxu0
    %v1557 = vpop.f32.mrb[0].mxu0
    %1558 = vdwg.mxu0
    %1560 = vrot.lane.b32.xlu0 %v1554, 48
    %v1561 = vpop.permute.xlu0 %1560
    %v1563 = vadd.f32 %v112, %v1561
    %v1564 = vtanh.pop %v1428
    %v1565 = vmul.f32 %v1564, 0.5
    %v1566 = vadd.f32 %v1565, 0.5
    %v1567 = vtanh.pop %v1473
    %v1568 = vmul.f32 %v1567, 0.5
    %v1569 = vadd.f32 %v1568, 0.5
    %v1570 = vtanh.pop %v1563
    %v1571 = vmul.f32 %v1570, 0.5
    %v1572 = vadd.f32 %v1571, 0.5
    %v1573 = vtanh.pop %v1518
    %v1574 = vmul.f32 %v1569, %v1374
    %1576 = vrot.lane.b32.xlu0 %v1573, 96
    %v1577 = vpop.permute.xlu0 %1576
    %v1579 = vmul.f32 %v1566, %v1577
    %1581 = vrot.lane.b32.xlu0 %v1579, 16
    %v1582 = vpop.permute.xlu0 %1581
    %v1584 = vadd.f32 %v1574, %v1582
    %v1585 = vtanh.pop %v1584
    %1587 = vrot.lane.b32.xlu0 %v1585, 32
    %v1588 = vpop.permute.xlu0 %1587
    %v1590 = vmul.f32 %v1572, %v1588
    %v1591 = vpack.c.bf16 %v1590, %v1590
    %1593 = vrot.lane.b32.xlu0 %v1591, 80
    %v1594 = vpop.permute.xlu0 %1593
    %v1596 = vsel %vm114, %v1594, 0
    %1598 = vmatprep.subr.bf16.mxu0 0
    %1599 = vmatpush1.bf16.msra.mxu0 %v33
    %1600 = vmatprep.subr.bf16.mxu0 0
    %1601 = vmatpush1.bf16.msra.mxu0 0
    %1602 = vmatprep.subr.bf16.mxu0 0
    %1603 = vmatpush1.bf16.msra.mxu0 0
    %1604 = vmatprep.subr.bf16.mxu0 0
    %1605 = vmatpush1.bf16.msra.mxu0 0
    %1606 = vmatprep.subr.bf16.mxu0 0
    %1607 = vmatpush1.bf16.msra.mxu0 0
    %1608 = vmatprep.subr.bf16.mxu0 0
    %1609 = vmatpush1.bf16.msra.mxu0 0
    %1610 = vmatprep.subr.bf16.mxu0 0
    %1611 = vmatpush1.bf16.msra.mxu0 0
    %1612 = vmatprep.subr.bf16.mxu0 0
    %1613 = vmatpush1.bf16.msra.mxu0 0
    %1614 = vmatprep.subr.bf16.mxu0 0
    %1615 = vmatpush1.bf16.msra.mxu0 0
    %1616 = vmatprep.subr.bf16.mxu0 0
    %1617 = vmatpush1.bf16.msra.mxu0 0
    %1618 = vmatprep.subr.bf16.mxu0 0
    %1619 = vmatpush1.bf16.msra.mxu0 0
    %1620 = vmatprep.subr.bf16.mxu0 0
    %1621 = vmatpush1.bf16.msra.mxu0 0
    %1622 = vmatprep.subr.bf16.mxu0 0
    %1623 = vmatpush1.bf16.msra.mxu0 0
    %1624 = vmatprep.subr.bf16.mxu0 0
    %1625 = vmatpush1.bf16.msra.mxu0 0
    %1626 = vmatprep.subr.bf16.mxu0 0
    %1627 = vmatpush1.bf16.msra.mxu0 0
    %1628 = vmatprep.subr.bf16.mxu0 0
    %1629 = vmatpush1.bf16.msra.mxu0 0
    %1630 = vmatprep.mubr.bf16.mxu0 0
    %1631 = vmatmul.mubr.bf16.gmra.mrb[0].mxu0 %v1596
    %v1632 = vpop.f32.mrb[0].mxu0
    %v1633 = vadd.f32 0.0, %v1632
    %v1634 = vpop.f32.mrb[0].mxu0
    %v1635 = vpop.f32.mrb[0].mxu0
    %v1636 = vpop.f32.mrb[0].mxu0
    %1637 = vdwg.mxu0
    %v1638 = vadd.f32 %v113, %v1633
    %1639 = vmatprep.subr.bf16.mxu0 0
    %1640 = vmatpush1.bf16.msra.mxu0 %v161
    %1641 = vmatprep.subr.bf16.mxu0 0
    %1642 = vmatpush1.bf16.msra.mxu0 0
    %1643 = vmatprep.subr.bf16.mxu0 0
    %1644 = vmatpush1.bf16.msra.mxu0 0
    %1645 = vmatprep.subr.bf16.mxu0 0
    %1646 = vmatpush1.bf16.msra.mxu0 0
    %1647 = vmatprep.subr.bf16.mxu0 0
    %1648 = vmatpush1.bf16.msra.mxu0 0
    %1649 = vmatprep.subr.bf16.mxu0 0
    %1650 = vmatpush1.bf16.msra.mxu0 0
    %1651 = vmatprep.subr.bf16.mxu0 0
    %1652 = vmatpush1.bf16.msra.mxu0 0
    %1653 = vmatprep.subr.bf16.mxu0 0
    %1654 = vmatpush1.bf16.msra.mxu0 0
    %1655 = vmatprep.subr.bf16.mxu0 0
    %1656 = vmatpush1.bf16.msra.mxu0 0
    %1657 = vmatprep.subr.bf16.mxu0 0
    %1658 = vmatpush1.bf16.msra.mxu0 0
    %1659 = vmatprep.subr.bf16.mxu0 0
    %1660 = vmatpush1.bf16.msra.mxu0 0
    %1661 = vmatprep.subr.bf16.mxu0 0
    %1662 = vmatpush1.bf16.msra.mxu0 0
    %1663 = vmatprep.subr.bf16.mxu0 0
    %1664 = vmatpush1.bf16.msra.mxu0 0
    %1665 = vmatprep.subr.bf16.mxu0 0
    %1666 = vmatpush1.bf16.msra.mxu0 0
    %1667 = vmatprep.subr.bf16.mxu0 0
    %1668 = vmatpush1.bf16.msra.mxu0 0
    %1669 = vmatprep.subr.bf16.mxu0 0
    %1670 = vmatpush1.bf16.msra.mxu0 0
    %1671 = vmatprep.mubr.bf16.mxu0 0
    %1672 = vmatmul.mubr.bf16.gmra.mrb[0].mxu0 %v1596
    %v1673 = vpop.f32.mrb[0].mxu0
    %v1674 = vadd.f32 0.0, %v1673
    %v1675 = vpop.f32.mrb[0].mxu0
    %v1676 = vpop.f32.mrb[0].mxu0
    %v1677 = vpop.f32.mrb[0].mxu0
    %1678 = vdwg.mxu0
    %1680 = vrot.lane.b32.xlu0 %v1674, 16
    %v1681 = vpop.permute.xlu0 %1680
    %v1683 = vadd.f32 %v113, %v1681
    %1684 = vmatprep.subr.bf16.mxu0 0
    %1685 = vmatpush1.bf16.msra.mxu0 %v209
    %1686 = vmatprep.subr.bf16.mxu0 0
    %1687 = vmatpush1.bf16.msra.mxu0 0
    %1688 = vmatprep.subr.bf16.mxu0 0
    %1689 = vmatpush1.bf16.msra.mxu0 0
    %1690 = vmatprep.subr.bf16.mxu0 0
    %1691 = vmatpush1.bf16.msra.mxu0 0
    %1692 = vmatprep.subr.bf16.mxu0 0
    %1693 = vmatpush1.bf16.msra.mxu0 0
    %1694 = vmatprep.subr.bf16.mxu0 0
    %1695 = vmatpush1.bf16.msra.mxu0 0
    %1696 = vmatprep.subr.bf16.mxu0 0
    %1697 = vmatpush1.bf16.msra.mxu0 0
    %1698 = vmatprep.subr.bf16.mxu0 0
    %1699 = vmatpush1.bf16.msra.mxu0 0
    %1700 = vmatprep.subr.bf16.mxu0 0
    %1701 = vmatpush1.bf16.msra.mxu0 0
    %1702 = vmatprep.subr.bf16.mxu0 0
    %1703 = vmatpush1.bf16.msra.mxu0 0
    %1704 = vmatprep.subr.bf16.mxu0 0
    %1705 = vmatpush1.bf16.msra.mxu0 0
    %1706 = vmatprep.subr.bf16.mxu0 0
    %1707 = vmatpush1.bf16.msra.mxu0 0
    %1708 = vmatprep.subr.bf16.mxu0 0
    %1709 = vmatpush1.bf16.msra.mxu0 0
    %1710 = vmatprep.subr.bf16.mxu0 0
    %1711 = vmatpush1.bf16.msra.mxu0 0
    %1712 = vmatprep.subr.bf16.mxu0 0
    %1713 = vmatpush1.bf16.msra.mxu0 0
    %1714 = vmatprep.subr.bf16.mxu0 0
    %1715 = vmatpush1.bf16.msra.mxu0 0
    %1716 = vmatprep.mubr.bf16.mxu0 0
    %1717 = vmatmul.mubr.bf16.gmra.mrb[0].mxu0 %v1596
    %v1718 = vpop.f32.mrb[0].mxu0
    %v1719 = vadd.f32 0.0, %v1718
    %v1720 = vpop.f32.mrb[0].mxu0
    %v1721 = vpop.f32.mrb[0].mxu0
    %v1722 = vpop.f32.mrb[0].mxu0
    %1723 = vdwg.mxu0
    %1725 = vrot.lane.b32.xlu0 %v1719, 32
    %v1726 = vpop.permute.xlu0 %1725
    %v1728 = vadd.f32 %v113, %v1726
    %1729 = vmatprep.subr.bf16.mxu0 0
    %1730 = vmatpush1.bf16.msra.mxu0 %v257
    %1731 = vmatprep.subr.bf16.mxu0 0
    %1732 = vmatpush1.bf16.msra.mxu0 0
    %1733 = vmatprep.subr.bf16.mxu0 0
    %1734 = vmatpush1.bf16.msra.mxu0 0
    %1735 = vmatprep.subr.bf16.mxu0 0
    %1736 = vmatpush1.bf16.msra.mxu0 0
    %1737 = vmatprep.subr.bf16.mxu0 0
    %1738 = vmatpush1.bf16.msra.mxu0 0
    %1739 = vmatprep.subr.bf16.mxu0 0
    %1740 = vmatpush1.bf16.msra.mxu0 0
    %1741 = vmatprep.subr.bf16.mxu0 0
    %1742 = vmatpush1.bf16.msra.mxu0 0
    %1743 = vmatprep.subr.bf16.mxu0 0
    %1744 = vmatpush1.bf16.msra.mxu0 0
    %1745 = vmatprep.subr.bf16.mxu0 0
    %1746 = vmatpush1.bf16.msra.mxu0 0
    %1747 = vmatprep.subr.bf16.mxu0 0
    %1748 = vmatpush1.bf16.msra.mxu0 0
    %1749 = vmatprep.subr.bf16.mxu0 0
    %1750 = vmatpush1.bf16.msra.mxu0 0
    %1751 = vmatprep.subr.bf16.mxu0 0
    %1752 = vmatpush1.bf16.msra.mxu0 0
    %1753 = vmatprep.subr.bf16.mxu0 0
    %1754 = vmatpush1.bf16.msra.mxu0 0
    %1755 = vmatprep.subr.bf16.mxu0 0
    %1756 = vmatpush1.bf16.msra.mxu0 0
    %1757 = vmatprep.subr.bf16.mxu0 0
    %1758 = vmatpush1.bf16.msra.mxu0 0
    %1759 = vmatprep.subr.bf16.mxu0 0
    %1760 = vmatpush1.bf16.msra.mxu0 0
    %1761 = vmatprep.mubr.bf16.mxu0 0
    %1762 = vmatmul.mubr.bf16.gmra.mrb[0].mxu0 %v1596
    %v1763 = vpop.f32.mrb[0].mxu0
    %v1764 = vadd.f32 0.0, %v1763
    %v1765 = vpop.f32.mrb[0].mxu0
    %v1766 = vpop.f32.mrb[0].mxu0
    %v1767 = vpop.f32.mrb[0].mxu0
    %1768 = vdwg.mxu0
    %1770 = vrot.lane.b32.xlu0 %v1764, 48
    %v1771 = vpop.permute.xlu0 %1770
    %v1773 = vadd.f32 %v113, %v1771
    %v1774 = vtanh.pop %v1638
    %v1775 = vmul.f32 %v1774, 0.5
    %v1776 = vadd.f32 %v1775, 0.5
    %v1777 = vtanh.pop %v1683
    %v1778 = vmul.f32 %v1777, 0.5
    %v1779 = vadd.f32 %v1778, 0.5
    %v1780 = vtanh.pop %v1773
    %v1781 = vmul.f32 %v1780, 0.5
    %v1782 = vadd.f32 %v1781, 0.5
    %v1783 = vtanh.pop %v1728
    %v1784 = vmul.f32 %v1779, %v1584
    %1786 = vrot.lane.b32.xlu0 %v1783, 96
    %v1787 = vpop.permute.xlu0 %1786
    %v1789 = vmul.f32 %v1776, %v1787
    %1791 = vrot.lane.b32.xlu0 %v1789, 16
    %v1792 = vpop.permute.xlu0 %1791
    %v1794 = vadd.f32 %v1784, %v1792
    %v1795 = vtanh.pop %v1794
    %1797 = vrot.lane.b32.xlu0 %v1795, 32
    %v1798 = vpop.permute.xlu0 %1797
    %v1800 = vmul.f32 %v1782, %v1798
    %v1801 = vlaneseq
    %v1802 = vshrl.u32 %v1801, 7
    %v1803 = vsub.s32 0, %v1802
    %v1804 = vrot.slane %v31, %v1803
    %1806 = vrot.lane.b32.xlu0 %v1804, 48
    %v1807 = vpop.permute.xlu0 %1806
    %v1809 = vmul.f32 %v1800, %v1807
    %1811 = vrot.lane.b32.xlu0 %v1809, 80
    %v1812 = vpop.permute.xlu0 %1811
    %vm1814 = vcmask 123904
    %v1815 = vsel %vm1814, %v1812, 0.0
    %1816 = vadd.xlane.f32.xlu0 %v1815
    %v1817 = vpop.xlane.xlu0 %1816
    %v1818 = vlaneseq
    %v1819 = vshrl.u32 %v1818, 7
    %v1820 = vsub.s32 0, %v1819
    %v1821 = vrot.slane %v32, %v1820
    %v1822 = vadd.f32 %v1817, %v1821
    %vm1823 = vcmask 1024
    %1824 = vst.msk [vmem:[%s2] sm:$0x3] %vm1823, %v1822
    // Predicated region
    $region14: #{tpu_custom_call.1} parent=1 // pred_check
      _
    $region15: #{tpu_custom_call.1} parent=1 // pred_check_branch
      %1826 = sbr.rel (0) target = $region17
    $region16: #{tpu_custom_call.1} parent=1 // pred_region
      _
    $region17: #{tpu_custom_call.1} parent=1 // pred_fallthru
      _
    // Predicated region
    $region18: #{tpu_custom_call.1} parent=1 // pred_check
      _
    $region19: #{tpu_custom_call.1} parent=1 // pred_check_branch
      %1828 = sbr.rel (0) target = $region21
    $region20: #{tpu_custom_call.1} parent=1 // pred_region
      _
    $region21: #{tpu_custom_call.1} parent=1 // pred_fallthru
      _
    %1829 = vsyncpa [#allocation3], 1

</llo_original>
